<compile_context>
chip_gen: v5e
topology: v5e:2x2
jax: 0.10.0
libtpu: 0.0.40
codegen_flags: <defaults>
</compile_context>

<pallas_src>
import functools
import math

import jax
import jax.numpy as jnp
from jax import lax
from jax.experimental import pallas as pl
from jax.experimental.pallas import tpu as pltpu

EPS = 1e-6


def _layer_norm(v, gamma, beta):
    # torch code in this module: std is the unbiased (N-1) estimator, eps added to std.
    d = v.shape[-1]
    mean = jnp.mean(v, axis=-1, keepdims=True)
    var = jnp.sum((v - mean) ** 2, axis=-1, keepdims=True) * (1.0 / (d - 1))
    # exact divide: the operand is only (rows, 1), approx error would land in the
    # residual stream and both matmul inputs for no measurable perf gain.
    return gamma * ((v - mean) / (jnp.sqrt(var) + EPS)) + beta


def decoder_layer_kernel(n_heads,
                         x_ref, m_ref,
                         wq_ref, bq_ref, wk_ref, bk_ref, wv_ref, bv_ref,
                         wo_ref, bo_ref,
                         w1_ref, b1_ref, w2_ref, b2_ref,
                         g1_ref, be1_ref, g2_ref, be2_ref,
                         out_ref, attn_ref,
                         k_sc, v_sc):
    cdt = wq_ref.dtype                      # MXU compute dtype (bf16 from the wrapper)
    x = x_ref[0]                            # (TQ, D) f32 query-row tile
    TQ, D = x.shape
    Tk = v_sc.shape[1]
    dk = D // n_heads
    qi = pl.program_id(1)

    # ---- K/V projections: once per batch element, head-major & pre-transposed ----
    @pl.when(qi == 0)
    def _():
        mc = m_ref[0]                                                # (Tk, D) bf16
        k = jnp.dot(mc, wk_ref[...], preferred_element_type=jnp.float32) + bk_ref[...]
        v = jnp.dot(mc, wv_ref[...], preferred_element_type=jnp.float32) + bv_ref[...]
        # (Tk, D) -> (D, Tk) -> (H, dk, Tk): one 2-D transpose, amortized over q tiles.
        k_sc[...] = k.T.reshape(n_heads, dk, Tk).astype(cdt)
        # (H, dk, Tk) -> (H, Tk, dk): batched minor-dims transpose, also once per batch.
        v_sc[...] = jnp.swapaxes(v.T.reshape(n_heads, dk, Tk), 1, 2).astype(cdt)

    # ---- sublayer 0: pre-LN multi-head cross attention + residual ----
    xn = _layer_norm(x, g1_ref[...], be1_ref[...])
    # wq / bq are pre-scaled by 1/sqrt(dk) in the wrapper.
    q2 = jnp.dot(xn.astype(cdt), wq_ref[...],
                 preferred_element_type=jnp.float32) + bq_ref[...]          # (TQ, D)
    q3 = jnp.swapaxes(q2.T.reshape(n_heads, dk, TQ), 1, 2).astype(cdt)      # (H, TQ, dk)

    # scores: NN batched matmul (H, TQ, dk) x (H, dk, Tk) -> (H, TQ, Tk) f32
    s = lax.dot_general(q3, k_sc[...],
                        dimension_numbers=(((2,), (1,)), ((0,), (0,))),
                        preferred_element_type=jnp.float32)
    s = jnp.exp(s - jnp.max(s, axis=-1, keepdims=True))
    p = s * pl.reciprocal(jnp.sum(s, axis=-1, keepdims=True), approx=True)
    attn_ref[0] = p.astype(attn_ref.dtype)                  # one lane-dense store

    # PV: feed from the output block (drops a live (H,TQ,Tk) temporary)
    ctx = lax.dot_general(attn_ref[0].astype(cdt), v_sc[...],
                          dimension_numbers=(((2,), (1,)), ((0,), (0,))),
                          preferred_element_type=jnp.float32)               # (H, TQ, dk)
    # output projection: per-head (H,TQ,dk) x (H,dk,D) -> (H,TQ,D), then sum over heads
    o_h = lax.dot_general(ctx.astype(cdt), wo_ref[...],
                          dimension_numbers=(((2,), (1,)), ((0,), (0,))),
                          preferred_element_type=jnp.float32)
    x1 = x + jnp.sum(o_h, axis=0) + bo_ref[...]

    # ---- sublayer 1: pre-LN feed-forward + residual ----
    x1n = _layer_norm(x1, g2_ref[...], be2_ref[...])
    h1 = jnp.maximum(
        jnp.dot(x1n.astype(cdt), w1_ref[...],
                preferred_element_type=jnp.float32) + b1_ref[...], 0.0)
    ff = jnp.dot(h1.astype(cdt), w2_ref[...],
                 preferred_element_type=jnp.float32) + b2_ref[...]
    out_ref[0] = x1 + ff


def _vmem_limit_bytes():
    """Generation-aware scoped-VMEM limit: ~3/4 of physical, capped at 100 MiB."""
    cap = 128 * 1024 * 1024
    if hasattr(pltpu, "get_tpu_info"):
        try:
            cap = int(getattr(pltpu.get_tpu_info(), "vmem_capacity_bytes", cap))
        except Exception:
            pass   # hardware query only; never masks kernel compile errors
    return min(cap * 3 // 4, 100 * 1024 * 1024)


def _choose_q_tile(Tq, Tk, D, dff, n_heads, attn_bytes, mxu_bytes, vmem_budget):
    """Largest query tile whose per-tile working set fits the VMEM budget."""
    dk = D // n_heads
    weight_bytes = (3 * D * D + n_heads * dk * D + 2 * D * dff) * mxu_bytes
    fixed = (2 * weight_bytes            # weights (double-buffered worst case)
             + 2 * Tk * D * mxu_bytes    # memory block (double-buffered)
             + 2 * Tk * D * mxu_bytes)   # K/V scratch
    for cand in (256, 128, 64, 32, 16, 8):
        if Tq % cand != 0:
            continue
        per_tile = (2 * n_heads * cand * Tk * attn_bytes   # attn output block (2 bufs)
                    + 3 * n_heads * cand * Tk * 4          # softmax temporaries
                    + n_heads * cand * D * 4               # per-head out-proj temporary
                    + 2 * cand * max(D, dff) * 4           # FFN hidden / activations
                    + 4 * cand * D * 4)                    # x / out blocks (2 bufs each)
        if fixed + per_tile <= vmem_budget:
            return cand
    for cand in (8, 16, 32, 64, 128, 256):
        if Tq % cand == 0:
            return cand
    return Tq


def decoder_layer(x, hidden_states, params, n_heads,
                  q_tile=None, mxu_dtype=jnp.bfloat16, attn_dtype=jnp.float32):
    B, Tq, D = x.shape
    Tk = hidden_states.shape[1]
    dff = params["w1"].shape[1]
    assert D % n_heads == 0
    dk = D // n_heads
    scale = 1.0 / math.sqrt(dk)

    mxu_bytes = jnp.dtype(mxu_dtype).itemsize
    attn_bytes = jnp.dtype(attn_dtype).itemsize
    vmem_limit = _vmem_limit_bytes()

    TQ = q_tile if q_tile is not None else _choose_q_tile(
        Tq, Tk, D, dff, n_heads, attn_bytes, mxu_bytes, int(vmem_limit * 0.8))
    assert Tq % TQ == 0
    NQ = Tq // TQ

    # MXU operands are cast once here (bf16: half HBM/VMEM, native MXU rate).
    # Biases / LayerNorm params stay f32. 1/sqrt(dk) folded into wq/bq.
    wq = (params["wq"] * scale).astype(mxu_dtype)
    bq = params["bq"] * scale
    wk = params["wk"].astype(mxu_dtype)
    wv = params["wv"].astype(mxu_dtype)
    wo_r = params["wo"].reshape(n_heads, dk, D).astype(mxu_dtype)   # head-major out proj
    w1 = params["w1"].astype(mxu_dtype)
    w2 = params["w2"].astype(mxu_dtype)
    m_in = hidden_states.astype(mxu_dtype)     # memory only ever feeds the MXU as bf16

    def rep(shape):
        return pl.BlockSpec(shape, lambda b, qi: (0,) * len(shape))

    in_specs = [
        pl.BlockSpec((1, TQ, D), lambda b, qi: (b, qi, 0)),    # x (query rows)
        pl.BlockSpec((1, Tk, D), lambda b, qi: (b, 0, 0)),     # memory (qi-invariant)
        rep((D, D)), rep((1, D)),                              # wq, bq
        rep((D, D)), rep((1, D)),                              # wk, bk
        rep((D, D)), rep((1, D)),                              # wv, bv
        rep((n_heads, dk, D)), rep((1, D)),                    # wo (head-major), bo
        rep((D, dff)), rep((1, dff)),                          # w1, b1
        rep((dff, D)), rep((1, D)),                            # w2, b2
        rep((1, D)), rep((1, D)),                              # gamma1, beta1
        rep((1, D)), rep((1, D)),                              # gamma2, beta2
    ]
    out_specs = [
        pl.BlockSpec((1, TQ, D), lambda b, qi: (b, qi, 0)),
        pl.BlockSpec((1, n_heads, TQ, Tk), lambda b, qi: (b, 0, qi, 0)),
    ]
    out_shape = (
        jax.ShapeDtypeStruct((B, Tq, D), jnp.float32),
        jax.ShapeDtypeStruct((B, n_heads, Tq, Tk), attn_dtype),
    )
    scratch_shapes = [
        pltpu.VMEM((n_heads, dk, Tk), mxu_dtype),   # K^T, head-major (reused across q tiles)
        pltpu.VMEM((n_heads, Tk, dk), mxu_dtype),   # V,   head-major
    ]

    return pl.pallas_call(
        functools.partial(decoder_layer_kernel, n_heads),
        out_shape=out_shape,
        grid_spec=pltpu.PrefetchScalarGridSpec(
            num_scalar_prefetch=0,
            grid=(B, NQ),
            in_specs=in_specs,
            out_specs=out_specs,
            scratch_shapes=scratch_shapes,
        ),
        compiler_params=pltpu.CompilerParams(
            # B may be split across TensorCores; qi must stay sequential so the K/V
            # scratch written at qi == 0 stays valid for the remaining query tiles.
            dimension_semantics=("parallel", "arbitrary"),
            vmem_limit_bytes=vmem_limit,
        ),
    )(x, m_in,
      wq, bq, wk, params["bk"], wv, params["bv"], wo_r, params["bo"],
      w1, params["b1"], w2, params["b2"],
      params["g1"], params["be1"], params["g2"], params["be2"])


# -------------------- pure-JAX f32 reference (silent correctness check) --------------------
def _ln_ref(v, g, b):
    d = v.shape[-1]
    mean = jnp.mean(v, axis=-1, keepdims=True)
    var = jnp.sum((v - mean) ** 2, axis=-1, keepdims=True) / (d - 1)
    return g * (v - mean) / (jnp.sqrt(var) + EPS) + b


def decoder_layer_ref(x, m, p, n_heads):
    B, Tq, D = x.shape
    Tk = m.shape[1]
    dk = D // n_heads
    xn = _ln_ref(x, p["g1"][0], p["be1"][0])
    q = xn @ p["wq"] + p["bq"][0]
    k = m @ p["wk"] + p["bk"][0]
    v = m @ p["wv"] + p["bv"][0]
    qh = q.reshape(B, Tq, n_heads, dk).transpose(0, 2, 1, 3)
    kh = k.reshape(B, Tk, n_heads, dk).transpose(0, 2, 1, 3)
    vh = v.reshape(B, Tk, n_heads, dk).transpose(0, 2, 1, 3)
    scores = jnp.einsum("bhqd,bhkd->bhqk", qh, kh) / math.sqrt(dk)
    attn = jax.nn.softmax(scores, axis=-1)
    ctx = jnp.einsum("bhqk,bhkd->bhqd", attn, vh).transpose(0, 2, 1, 3).reshape(B, Tq, D)
    x1 = x + (ctx @ p["wo"] + p["bo"][0])
    x1n = _ln_ref(x1, p["g2"][0], p["be2"][0])
    ff = jnp.maximum(x1n @ p["w1"] + p["b1"][0], 0.0) @ p["w2"] + p["b2"][0]
    return x1 + ff, attn


if __name__ == "__main__":
    B, Tq, Tk, D, H, DFF = 2, 8, 8, 32, 4, 64

    key = jax.random.PRNGKey(0)
    keys = jax.random.split(key, 12)
    x = jax.random.normal(keys[0], (B, Tq, D), dtype=jnp.float32)
    hidden_states = jax.random.normal(keys[1], (B, Tk, D), dtype=jnp.float32)

    def w(k, shape, scale=0.1):
        return scale * jax.random.normal(k, shape, dtype=jnp.float32)

    params = {
        "wq": w(keys[2], (D, D)), "bq": w(keys[3], (1, D), 0.01),
        "wk": w(keys[4], (D, D)), "bk": w(keys[5], (1, D), 0.01),
        "wv": w(keys[6], (D, D)), "bv": w(keys[7], (1, D), 0.01),
        "wo": w(keys[8], (D, D)), "bo": w(keys[9], (1, D), 0.01),
        "w1": w(keys[10], (D, DFF)), "b1": jnp.zeros((1, DFF), jnp.float32),
        "w2": w(keys[11], (DFF, D)), "b2": jnp.zeros((1, D), jnp.float32),
        "g1": jnp.ones((1, D), jnp.float32), "be1": jnp.zeros((1, D), jnp.float32),
        "g2": jnp.ones((1, D), jnp.float32), "be2": jnp.zeros((1, D), jnp.float32),
    }

    out, attn = decoder_layer(x, hidden_states, params, H)
    jax.block_until_ready((out, attn))

    out_ref, attn_ref = decoder_layer_ref(x, hidden_states, params, H)
    # bf16 MXU operands + approx softmax reciprocal -> compare against the f32
    # reference with a loose but structure-bug-catching tolerance.
    assert jnp.allclose(out, out_ref, rtol=2e-2, atol=2e-2), \
        float(jnp.max(jnp.abs(out - out_ref)))
    assert jnp.allclose(attn, attn_ref, rtol=2e-2, atol=2e-2), \
        float(jnp.max(jnp.abs(attn - attn_ref)))

    print("KERNEL_OK")
</pallas_src>

<mosaic_0001>
module attributes {stable_mosaic.version = 11 : i64} {
  func.func @decoder_layer_kernel(%arg0: i32, %arg1: i32, %arg2: memref<1x8x32xf32, #tpu.memory_space<vmem>>, %arg3: memref<1x8x32xbf16, #tpu.memory_space<vmem>>, %arg4: memref<32x32xbf16, #tpu.memory_space<vmem>>, %arg5: memref<1x32xf32, #tpu.memory_space<vmem>>, %arg6: memref<32x32xbf16, #tpu.memory_space<vmem>>, %arg7: memref<1x32xf32, #tpu.memory_space<vmem>>, %arg8: memref<32x32xbf16, #tpu.memory_space<vmem>>, %arg9: memref<1x32xf32, #tpu.memory_space<vmem>>, %arg10: memref<4x8x32xbf16, #tpu.memory_space<vmem>>, %arg11: memref<1x32xf32, #tpu.memory_space<vmem>>, %arg12: memref<32x64xbf16, #tpu.memory_space<vmem>>, %arg13: memref<1x64xf32, #tpu.memory_space<vmem>>, %arg14: memref<64x32xbf16, #tpu.memory_space<vmem>>, %arg15: memref<1x32xf32, #tpu.memory_space<vmem>>, %arg16: memref<1x32xf32, #tpu.memory_space<vmem>>, %arg17: memref<1x32xf32, #tpu.memory_space<vmem>>, %arg18: memref<1x32xf32, #tpu.memory_space<vmem>>, %arg19: memref<1x32xf32, #tpu.memory_space<vmem>>, %arg20: memref<1x8x32xf32, #tpu.memory_space<vmem>>, %arg21: memref<1x4x8x8xf32, #tpu.memory_space<vmem>>, %arg22: memref<4x8x8xbf16, #tpu.memory_space<vmem>>, %arg23: memref<4x8x8xbf16, #tpu.memory_space<vmem>>) attributes {dimension_semantics = [#tpu.dimension_semantics<parallel>, #tpu.dimension_semantics<arbitrary>], iteration_bounds = array<i64: 2, 1>, scalar_prefetch = 0 : i64, scratch_operands = 2 : i64, tpu.core_type = #tpu.core_type<tc>, window_params = [{transform_indices = @transform_0, window_bounds = array<i64: 1, 8, 32>}, {transform_indices = @transform_1, window_bounds = array<i64: 1, 8, 32>}, {pipeline_mode = #tpu.pipeline_mode<synchronous>, transform_indices = @transform_2, window_bounds = array<i64: 32, 32>}, {pipeline_mode = #tpu.pipeline_mode<synchronous>, transform_indices = @transform_3, window_bounds = array<i64: 1, 32>}, {pipeline_mode = #tpu.pipeline_mode<synchronous>, transform_indices = @transform_4, window_bounds = array<i64: 32, 32>}, {pipeline_mode = #tpu.pipeline_mode<synchronous>, transform_indices = @transform_5, window_bounds = array<i64: 1, 32>}, {pipeline_mode = #tpu.pipeline_mode<synchronous>, transform_indices = @transform_6, window_bounds = array<i64: 32, 32>}, {pipeline_mode = #tpu.pipeline_mode<synchronous>, transform_indices = @transform_7, window_bounds = array<i64: 1, 32>}, {pipeline_mode = #tpu.pipeline_mode<synchronous>, transform_indices = @transform_8, window_bounds = array<i64: 4, 8, 32>}, {pipeline_mode = #tpu.pipeline_mode<synchronous>, transform_indices = @transform_9, window_bounds = array<i64: 1, 32>}, {pipeline_mode = #tpu.pipeline_mode<synchronous>, transform_indices = @transform_10, window_bounds = array<i64: 32, 64>}, {pipeline_mode = #tpu.pipeline_mode<synchronous>, transform_indices = @transform_11, window_bounds = array<i64: 1, 64>}, {pipeline_mode = #tpu.pipeline_mode<synchronous>, transform_indices = @transform_12, window_bounds = array<i64: 64, 32>}, {pipeline_mode = #tpu.pipeline_mode<synchronous>, transform_indices = @transform_13, window_bounds = array<i64: 1, 32>}, {pipeline_mode = #tpu.pipeline_mode<synchronous>, transform_indices = @transform_14, window_bounds = array<i64: 1, 32>}, {pipeline_mode = #tpu.pipeline_mode<synchronous>, transform_indices = @transform_15, window_bounds = array<i64: 1, 32>}, {pipeline_mode = #tpu.pipeline_mode<synchronous>, transform_indices = @transform_16, window_bounds = array<i64: 1, 32>}, {pipeline_mode = #tpu.pipeline_mode<synchronous>, transform_indices = @transform_17, window_bounds = array<i64: 1, 32>}, {transform_indices = @transform_18, window_bounds = array<i64: 1, 8, 32>}, {transform_indices = @transform_19, window_bounds = array<i64: 1, 4, 8, 8>}]} {
    %c0 = arith.constant 0 : index
    %c0_0 = arith.constant 0 : index
    %c0_1 = arith.constant 0 : index
    %0 = vector.load %arg2[%c0, %c0_0, %c0_1] : memref<1x8x32xf32, #tpu.memory_space<vmem>>, vector<1x8x32xf32>
    %1 = vector.shape_cast %0 : vector<1x8x32xf32> to vector<8x32xf32>
    %c0_i32 = arith.constant 0 : i32
    %2 = arith.cmpi eq, %arg1, %c0_i32 : i32
    %3 = arith.extui %2 : i1 to i32
    %c0_i32_2 = arith.constant 0 : i32
    %4 = arith.cmpi ne, %3, %c0_i32_2 : i32
    scf.if %4 {
      %c0_64 = arith.constant 0 : index
      %c0_65 = arith.constant 0 : index
      %c0_66 = arith.constant 0 : index
      %109 = vector.load %arg3[%c0_64, %c0_65, %c0_66] : memref<1x8x32xbf16, #tpu.memory_space<vmem>>, vector<1x8x32xbf16>
      %110 = vector.shape_cast %109 : vector<1x8x32xbf16> to vector<8x32xbf16>
      %c0_67 = arith.constant 0 : index
      %c0_68 = arith.constant 0 : index
      %111 = vector.load %arg6[%c0_67, %c0_68] : memref<32x32xbf16, #tpu.memory_space<vmem>>, vector<32x32xbf16>
      %cst_69 = arith.constant dense<0.000000e+00> : vector<8x32xf32>
      %112 = tpu.matmul %110, %111, %cst_69 {dimension_numbers = #tpu.dot_dimension_numbers<[1], [0], [0], [1], [0, 0, 1, 1], [], []>} : vector<8x32xbf16>, vector<32x32xbf16>, vector<8x32xf32> -> vector<8x32xf32>
      %c0_70 = arith.constant 0 : index
      %c0_71 = arith.constant 0 : index
      %113 = vector.load %arg7[%c0_70, %c0_71] : memref<1x32xf32, #tpu.memory_space<vmem>>, vector<1x32xf32>
      %114 = vector.broadcast %113 : vector<1x32xf32> to vector<8x32xf32>
      %115 = arith.addf %112, %114 : vector<8x32xf32>
      %c0_72 = arith.constant 0 : index
      %c0_73 = arith.constant 0 : index
      %116 = vector.load %arg8[%c0_72, %c0_73] : memref<32x32xbf16, #tpu.memory_space<vmem>>, vector<32x32xbf16>
      %cst_74 = arith.constant dense<0.000000e+00> : vector<8x32xf32>
      %117 = tpu.matmul %110, %116, %cst_74 {dimension_numbers = #tpu.dot_dimension_numbers<[1], [0], [0], [1], [0, 0, 1, 1], [], []>} : vector<8x32xbf16>, vector<32x32xbf16>, vector<8x32xf32> -> vector<8x32xf32>
      %c0_75 = arith.constant 0 : index
      %c0_76 = arith.constant 0 : index
      %118 = vector.load %arg9[%c0_75, %c0_76] : memref<1x32xf32, #tpu.memory_space<vmem>>, vector<1x32xf32>
      %119 = vector.broadcast %118 : vector<1x32xf32> to vector<8x32xf32>
      %120 = arith.addf %117, %119 : vector<8x32xf32>
      %121 = tpu.transpose %115, [1, 0] : vector<8x32xf32> -> vector<32x8xf32>
      %122 = vector.shape_cast %121 : vector<32x8xf32> to vector<4x8x8xf32>
      %123 = arith.truncf %122 : vector<4x8x8xf32> to vector<4x8x8xbf16>
      %c0_77 = arith.constant 0 : index
      %c0_78 = arith.constant 0 : index
      %c0_79 = arith.constant 0 : index
      %124 = vector.load %arg22[%c0_77, %c0_78, %c0_79] : memref<4x8x8xbf16, #tpu.memory_space<vmem>>, vector<4x8x8xbf16>
      tpu.vector_store %arg22[%c0_77, %c0_78, %c0_79], %123 {strides = array<i32>} : memref<4x8x8xbf16, #tpu.memory_space<vmem>>, vector<4x8x8xbf16>,
      %125 = tpu.transpose %120, [1, 0] : vector<8x32xf32> -> vector<32x8xf32>
      %126 = vector.shape_cast %125 : vector<32x8xf32> to vector<4x8x8xf32>
      %127 = tpu.transpose %126, [0, 2, 1] : vector<4x8x8xf32> -> vector<4x8x8xf32>
      %128 = arith.truncf %127 : vector<4x8x8xf32> to vector<4x8x8xbf16>
      %c0_80 = arith.constant 0 : index
      %c0_81 = arith.constant 0 : index
      %c0_82 = arith.constant 0 : index
      %129 = vector.load %arg23[%c0_80, %c0_81, %c0_82] : memref<4x8x8xbf16, #tpu.memory_space<vmem>>, vector<4x8x8xbf16>
      tpu.vector_store %arg23[%c0_80, %c0_81, %c0_82], %128 {strides = array<i32>} : memref<4x8x8xbf16, #tpu.memory_space<vmem>>, vector<4x8x8xbf16>,
    } else {
    }
    %c0_3 = arith.constant 0 : index
    %c0_4 = arith.constant 0 : index
    %5 = vector.load %arg16[%c0_3, %c0_4] : memref<1x32xf32, #tpu.memory_space<vmem>>, vector<1x32xf32>
    %c0_5 = arith.constant 0 : index
    %c0_6 = arith.constant 0 : index
    %6 = vector.load %arg17[%c0_5, %c0_6] : memref<1x32xf32, #tpu.memory_space<vmem>>, vector<1x32xf32>
    %cst = arith.constant dense<0.000000e+00> : vector<8xf32>
    %7 = vector.multi_reduction <add>, %1, %cst [1] : vector<8x32xf32> to vector<8xf32>
    %8 = vector.shape_cast %7 : vector<8xf32> to vector<8x1xf32>
    %cst_7 = arith.constant 3.200000e+01 : f32
    %9 = vector.broadcast %cst_7 : f32 to vector<8x1xf32>
    %10 = arith.divf %8, %9 : vector<8x1xf32>
    %11 = vector.broadcast %10 : vector<8x1xf32> to vector<8x32xf32>
    %12 = arith.subf %1, %11 : vector<8x32xf32>
    %13 = arith.mulf %12, %12 : vector<8x32xf32>
    %cst_8 = arith.constant dense<0.000000e+00> : vector<8xf32>
    %14 = vector.multi_reduction <add>, %13, %cst_8 [1] : vector<8x32xf32> to vector<8xf32>
    %15 = vector.shape_cast %14 : vector<8xf32> to vector<8x1xf32>
    %cst_9 = arith.constant 0.0322580636 : f32
    %16 = vector.broadcast %cst_9 : f32 to vector<8x1xf32>
    %17 = arith.mulf %15, %16 : vector<8x1xf32>
    %18 = vector.broadcast %10 : vector<8x1xf32> to vector<8x32xf32>
    %19 = arith.subf %1, %18 : vector<8x32xf32>
    %20 = math.sqrt %17 : vector<8x1xf32>
    %cst_10 = arith.constant 9.99999997E-7 : f32
    %21 = vector.broadcast %cst_10 : f32 to vector<8x1xf32>
    %22 = arith.addf %20, %21 : vector<8x1xf32>
    %23 = vector.broadcast %22 : vector<8x1xf32> to vector<8x32xf32>
    %24 = arith.divf %19, %23 : vector<8x32xf32>
    %25 = vector.broadcast %5 : vector<1x32xf32> to vector<8x32xf32>
    %26 = arith.mulf %25, %24 : vector<8x32xf32>
    %27 = vector.broadcast %6 : vector<1x32xf32> to vector<8x32xf32>
    %28 = arith.addf %26, %27 : vector<8x32xf32>
    %29 = arith.truncf %28 : vector<8x32xf32> to vector<8x32xbf16>
    %c0_11 = arith.constant 0 : index
    %c0_12 = arith.constant 0 : index
    %30 = vector.load %arg4[%c0_11, %c0_12] : memref<32x32xbf16, #tpu.memory_space<vmem>>, vector<32x32xbf16>
    %cst_13 = arith.constant dense<0.000000e+00> : vector<8x32xf32>
    %31 = tpu.matmul %29, %30, %cst_13 {dimension_numbers = #tpu.dot_dimension_numbers<[1], [0], [0], [1], [0, 0, 1, 1], [], []>} : vector<8x32xbf16>, vector<32x32xbf16>, vector<8x32xf32> -> vector<8x32xf32>
    %c0_14 = arith.constant 0 : index
    %c0_15 = arith.constant 0 : index
    %32 = vector.load %arg5[%c0_14, %c0_15] : memref<1x32xf32, #tpu.memory_space<vmem>>, vector<1x32xf32>
    %33 = vector.broadcast %32 : vector<1x32xf32> to vector<8x32xf32>
    %34 = arith.addf %31, %33 : vector<8x32xf32>
    %35 = tpu.transpose %34, [1, 0] : vector<8x32xf32> -> vector<32x8xf32>
    %36 = vector.shape_cast %35 : vector<32x8xf32> to vector<4x8x8xf32>
    %37 = tpu.transpose %36, [0, 2, 1] : vector<4x8x8xf32> -> vector<4x8x8xf32>
    %38 = arith.truncf %37 : vector<4x8x8xf32> to vector<4x8x8xbf16>
    %c0_16 = arith.constant 0 : index
    %c0_17 = arith.constant 0 : index
    %c0_18 = arith.constant 0 : index
    %39 = vector.load %arg22[%c0_16, %c0_17, %c0_18] : memref<4x8x8xbf16, #tpu.memory_space<vmem>>, vector<4x8x8xbf16>
    %cst_19 = arith.constant dense<0.000000e+00> : vector<4x8x8xf32>
    %40 = tpu.matmul %38, %39, %cst_19 {dimension_numbers = #tpu.dot_dimension_numbers<[2], [1], [1], [2], [0, 0, 0, 1, 1, 2], [0], [0]>} : vector<4x8x8xbf16>, vector<4x8x8xbf16>, vector<4x8x8xf32> -> vector<4x8x8xf32>
    %cst_20 = arith.constant dense<0xFF800000> : vector<4x8xf32>
    %41 = vector.multi_reduction <maximumf>, %40, %cst_20 [2] : vector<4x8x8xf32> to vector<4x8xf32>
    %42 = vector.shape_cast %41 : vector<4x8xf32> to vector<4x8x1xf32>
    %43 = vector.broadcast %42 : vector<4x8x1xf32> to vector<4x8x8xf32>
    %44 = arith.subf %40, %43 : vector<4x8x8xf32>
    %45 = math.exp %44 : vector<4x8x8xf32>
    %cst_21 = arith.constant dense<0.000000e+00> : vector<4x8xf32>
    %46 = vector.multi_reduction <add>, %45, %cst_21 [2] : vector<4x8x8xf32> to vector<4x8xf32>
    %47 = vector.shape_cast %46 : vector<4x8xf32> to vector<4x8x1xf32>
    %48 = tpu.reciprocal %47 {approx = true} : vector<4x8x1xf32> -> vector<4x8x1xf32>
    %49 = vector.broadcast %48 : vector<4x8x1xf32> to vector<4x8x8xf32>
    %50 = arith.mulf %45, %49 : vector<4x8x8xf32>
    %c0_22 = arith.constant 0 : index
    %c0_23 = arith.constant 0 : index
    %c0_24 = arith.constant 0 : index
    %c0_25 = arith.constant 0 : index
    %51 = vector.load %arg21[%c0_22, %c0_23, %c0_24, %c0_25] : memref<1x4x8x8xf32, #tpu.memory_space<vmem>>, vector<1x4x8x8xf32>
    %52 = vector.shape_cast %51 : vector<1x4x8x8xf32> to vector<4x8x8xf32>
    %53 = vector.shape_cast %50 : vector<4x8x8xf32> to vector<1x4x8x8xf32>
    tpu.vector_store %arg21[%c0_22, %c0_23, %c0_24, %c0_25], %53 {strides = array<i32>} : memref<1x4x8x8xf32, #tpu.memory_space<vmem>>, vector<1x4x8x8xf32>,
    %c0_26 = arith.constant 0 : index
    %c0_27 = arith.constant 0 : index
    %c0_28 = arith.constant 0 : index
    %c0_29 = arith.constant 0 : index
    %54 = vector.load %arg21[%c0_26, %c0_27, %c0_28, %c0_29] : memref<1x4x8x8xf32, #tpu.memory_space<vmem>>, vector<1x4x8x8xf32>
    %55 = vector.shape_cast %54 : vector<1x4x8x8xf32> to vector<4x8x8xf32>
    %56 = arith.truncf %55 : vector<4x8x8xf32> to vector<4x8x8xbf16>
    %c0_30 = arith.constant 0 : index
    %c0_31 = arith.constant 0 : index
    %c0_32 = arith.constant 0 : index
    %57 = vector.load %arg23[%c0_30, %c0_31, %c0_32] : memref<4x8x8xbf16, #tpu.memory_space<vmem>>, vector<4x8x8xbf16>
    %cst_33 = arith.constant dense<0.000000e+00> : vector<4x8x8xf32>
    %58 = tpu.matmul %56, %57, %cst_33 {dimension_numbers = #tpu.dot_dimension_numbers<[2], [1], [1], [2], [0, 0, 0, 1, 1, 2], [0], [0]>} : vector<4x8x8xbf16>, vector<4x8x8xbf16>, vector<4x8x8xf32> -> vector<4x8x8xf32>
    %59 = arith.truncf %58 : vector<4x8x8xf32> to vector<4x8x8xbf16>
    %c0_34 = arith.constant 0 : index
    %c0_35 = arith.constant 0 : index
    %c0_36 = arith.constant 0 : index
    %60 = vector.load %arg10[%c0_34, %c0_35, %c0_36] : memref<4x8x32xbf16, #tpu.memory_space<vmem>>, vector<4x8x32xbf16>
    %cst_37 = arith.constant dense<0.000000e+00> : vector<4x8x32xf32>
    %61 = tpu.matmul %59, %60, %cst_37 {dimension_numbers = #tpu.dot_dimension_numbers<[2], [1], [1], [2], [0, 0, 0, 1, 1, 2], [0], [0]>} : vector<4x8x8xbf16>, vector<4x8x32xbf16>, vector<4x8x32xf32> -> vector<4x8x32xf32>
    %cst_38 = arith.constant dense<0.000000e+00> : vector<8x32xf32>
    %62 = vector.multi_reduction <add>, %61, %cst_38 [0] : vector<4x8x32xf32> to vector<8x32xf32>
    %63 = arith.addf %1, %62 : vector<8x32xf32>
    %c0_39 = arith.constant 0 : index
    %c0_40 = arith.constant 0 : index
    %64 = vector.load %arg11[%c0_39, %c0_40] : memref<1x32xf32, #tpu.memory_space<vmem>>, vector<1x32xf32>
    %65 = vector.broadcast %64 : vector<1x32xf32> to vector<8x32xf32>
    %66 = arith.addf %63, %65 : vector<8x32xf32>
    %c0_41 = arith.constant 0 : index
    %c0_42 = arith.constant 0 : index
    %67 = vector.load %arg18[%c0_41, %c0_42] : memref<1x32xf32, #tpu.memory_space<vmem>>, vector<1x32xf32>
    %c0_43 = arith.constant 0 : index
    %c0_44 = arith.constant 0 : index
    %68 = vector.load %arg19[%c0_43, %c0_44] : memref<1x32xf32, #tpu.memory_space<vmem>>, vector<1x32xf32>
    %cst_45 = arith.constant dense<0.000000e+00> : vector<8xf32>
    %69 = vector.multi_reduction <add>, %66, %cst_45 [1] : vector<8x32xf32> to vector<8xf32>
    %70 = vector.shape_cast %69 : vector<8xf32> to vector<8x1xf32>
    %cst_46 = arith.constant 3.200000e+01 : f32
    %71 = vector.broadcast %cst_46 : f32 to vector<8x1xf32>
    %72 = arith.divf %70, %71 : vector<8x1xf32>
    %73 = vector.broadcast %72 : vector<8x1xf32> to vector<8x32xf32>
    %74 = arith.subf %66, %73 : vector<8x32xf32>
    %75 = arith.mulf %74, %74 : vector<8x32xf32>
    %cst_47 = arith.constant dense<0.000000e+00> : vector<8xf32>
    %76 = vector.multi_reduction <add>, %75, %cst_47 [1] : vector<8x32xf32> to vector<8xf32>
    %77 = vector.shape_cast %76 : vector<8xf32> to vector<8x1xf32>
    %cst_48 = arith.constant 0.0322580636 : f32
    %78 = vector.broadcast %cst_48 : f32 to vector<8x1xf32>
    %79 = arith.mulf %77, %78 : vector<8x1xf32>
    %80 = vector.broadcast %72 : vector<8x1xf32> to vector<8x32xf32>
    %81 = arith.subf %66, %80 : vector<8x32xf32>
    %82 = math.sqrt %79 : vector<8x1xf32>
    %cst_49 = arith.constant 9.99999997E-7 : f32
    %83 = vector.broadcast %cst_49 : f32 to vector<8x1xf32>
    %84 = arith.addf %82, %83 : vector<8x1xf32>
    %85 = vector.broadcast %84 : vector<8x1xf32> to vector<8x32xf32>
    %86 = arith.divf %81, %85 : vector<8x32xf32>
    %87 = vector.broadcast %67 : vector<1x32xf32> to vector<8x32xf32>
    %88 = arith.mulf %87, %86 : vector<8x32xf32>
    %89 = vector.broadcast %68 : vector<1x32xf32> to vector<8x32xf32>
    %90 = arith.addf %88, %89 : vector<8x32xf32>
    %91 = arith.truncf %90 : vector<8x32xf32> to vector<8x32xbf16>
    %c0_50 = arith.constant 0 : index
    %c0_51 = arith.constant 0 : index
    %92 = vector.load %arg12[%c0_50, %c0_51] : memref<32x64xbf16, #tpu.memory_space<vmem>>, vector<32x64xbf16>
    %cst_52 = arith.constant dense<0.000000e+00> : vector<8x64xf32>
    %93 = tpu.matmul %91, %92, %cst_52 {dimension_numbers = #tpu.dot_dimension_numbers<[1], [0], [0], [1], [0, 0, 1, 1], [], []>} : vector<8x32xbf16>, vector<32x64xbf16>, vector<8x64xf32> -> vector<8x64xf32>
    %c0_53 = arith.constant 0 : index
    %c0_54 = arith.constant 0 : index
    %94 = vector.load %arg13[%c0_53, %c0_54] : memref<1x64xf32, #tpu.memory_space<vmem>>, vector<1x64xf32>
    %95 = vector.broadcast %94 : vector<1x64xf32> to vector<8x64xf32>
    %96 = arith.addf %93, %95 : vector<8x64xf32>
    %cst_55 = arith.constant 0.000000e+00 : f32
    %97 = vector.broadcast %cst_55 : f32 to vector<8x64xf32>
    %98 = arith.maximumf %96, %97 : vector<8x64xf32>
    %99 = arith.truncf %98 : vector<8x64xf32> to vector<8x64xbf16>
    %c0_56 = arith.constant 0 : index
    %c0_57 = arith.constant 0 : index
    %100 = vector.load %arg14[%c0_56, %c0_57] : memref<64x32xbf16, #tpu.memory_space<vmem>>, vector<64x32xbf16>
    %cst_58 = arith.constant dense<0.000000e+00> : vector<8x32xf32>
    %101 = tpu.matmul %99, %100, %cst_58 {dimension_numbers = #tpu.dot_dimension_numbers<[1], [0], [0], [1], [0, 0, 1, 1], [], []>} : vector<8x64xbf16>, vector<64x32xbf16>, vector<8x32xf32> -> vector<8x32xf32>
    %c0_59 = arith.constant 0 : index
    %c0_60 = arith.constant 0 : index
    %102 = vector.load %arg15[%c0_59, %c0_60] : memref<1x32xf32, #tpu.memory_space<vmem>>, vector<1x32xf32>
    %103 = vector.broadcast %102 : vector<1x32xf32> to vector<8x32xf32>
    %104 = arith.addf %101, %103 : vector<8x32xf32>
    %105 = arith.addf %66, %104 : vector<8x32xf32>
    %c0_61 = arith.constant 0 : index
    %c0_62 = arith.constant 0 : index
    %c0_63 = arith.constant 0 : index
    %106 = vector.load %arg20[%c0_61, %c0_62, %c0_63] : memref<1x8x32xf32, #tpu.memory_space<vmem>>, vector<1x8x32xf32>
    %107 = vector.shape_cast %106 : vector<1x8x32xf32> to vector<8x32xf32>
    %108 = vector.shape_cast %105 : vector<8x32xf32> to vector<1x8x32xf32>
    tpu.vector_store %arg20[%c0_61, %c0_62, %c0_63], %108 {strides = array<i32>} : memref<1x8x32xf32, #tpu.memory_space<vmem>>, vector<1x8x32xf32>,
    return
  }
  func.func @transform_0(%arg0: i32, %arg1: i32) -> (i32, i32, i32) {
    %c0_i32 = arith.constant 0 : i32
    %c0_i32_0 = arith.constant 0 : i32
    return %arg0, %arg1, %c0_i32 : i32, i32, i32
  }
  func.func @transform_1(%arg0: i32, %arg1: i32) -> (i32, i32, i32) {
    %c0_i32 = arith.constant 0 : i32
    %c0_i32_0 = arith.constant 0 : i32
    %c0_i32_1 = arith.constant 0 : i32
    return %arg0, %c0_i32, %c0_i32_0 : i32, i32, i32
  }
  func.func @transform_2(%arg0: i32, %arg1: i32) -> (i32, i32) {
    %c0_i32 = arith.constant 0 : i32
    %c0_i32_0 = arith.constant 0 : i32
    %c0_i32_1 = arith.constant 0 : i32
    return %c0_i32, %c0_i32_0 : i32, i32
  }
  func.func @transform_3(%arg0: i32, %arg1: i32) -> (i32, i32) {
    %c0_i32 = arith.constant 0 : i32
    %c0_i32_0 = arith.constant 0 : i32
    %c0_i32_1 = arith.constant 0 : i32
    return %c0_i32, %c0_i32_0 : i32, i32
  }
  func.func @transform_4(%arg0: i32, %arg1: i32) -> (i32, i32) {
    %c0_i32 = arith.constant 0 : i32
    %c0_i32_0 = arith.constant 0 : i32
    %c0_i32_1 = arith.constant 0 : i32
    return %c0_i32, %c0_i32_0 : i32, i32
  }
  func.func @transform_5(%arg0: i32, %arg1: i32) -> (i32, i32) {
    %c0_i32 = arith.constant 0 : i32
    %c0_i32_0 = arith.constant 0 : i32
    %c0_i32_1 = arith.constant 0 : i32
    return %c0_i32, %c0_i32_0 : i32, i32
  }
  func.func @transform_6(%arg0: i32, %arg1: i32) -> (i32, i32) {
    %c0_i32 = arith.constant 0 : i32
    %c0_i32_0 = arith.constant 0 : i32
    %c0_i32_1 = arith.constant 0 : i32
    return %c0_i32, %c0_i32_0 : i32, i32
  }
  func.func @transform_7(%arg0: i32, %arg1: i32) -> (i32, i32) {
    %c0_i32 = arith.constant 0 : i32
    %c0_i32_0 = arith.constant 0 : i32
    %c0_i32_1 = arith.constant 0 : i32
    return %c0_i32, %c0_i32_0 : i32, i32
  }
  func.func @transform_8(%arg0: i32, %arg1: i32) -> (i32, i32, i32) {
    %c0_i32 = arith.constant 0 : i32
    %c0_i32_0 = arith.constant 0 : i32
    %c0_i32_1 = arith.constant 0 : i32
    %c0_i32_2 = arith.constant 0 : i32
    return %c0_i32, %c0_i32_0, %c0_i32_1 : i32, i32, i32
  }
  func.func @transform_9(%arg0: i32, %arg1: i32) -> (i32, i32) {
    %c0_i32 = arith.constant 0 : i32
    %c0_i32_0 = arith.constant 0 : i32
    %c0_i32_1 = arith.constant 0 : i32
    return %c0_i32, %c0_i32_0 : i32, i32
  }
  func.func @transform_10(%arg0: i32, %arg1: i32) -> (i32, i32) {
    %c0_i32 = arith.constant 0 : i32
    %c0_i32_0 = arith.constant 0 : i32
    %c0_i32_1 = arith.constant 0 : i32
    return %c0_i32, %c0_i32_0 : i32, i32
  }
  func.func @transform_11(%arg0: i32, %arg1: i32) -> (i32, i32) {
    %c0_i32 = arith.constant 0 : i32
    %c0_i32_0 = arith.constant 0 : i32
    %c0_i32_1 = arith.constant 0 : i32
    return %c0_i32, %c0_i32_0 : i32, i32
  }
  func.func @transform_12(%arg0: i32, %arg1: i32) -> (i32, i32) {
    %c0_i32 = arith.constant 0 : i32
    %c0_i32_0 = arith.constant 0 : i32
    %c0_i32_1 = arith.constant 0 : i32
    return %c0_i32, %c0_i32_0 : i32, i32
  }
  func.func @transform_13(%arg0: i32, %arg1: i32) -> (i32, i32) {
    %c0_i32 = arith.constant 0 : i32
    %c0_i32_0 = arith.constant 0 : i32
    %c0_i32_1 = arith.constant 0 : i32
    return %c0_i32, %c0_i32_0 : i32, i32
  }
  func.func @transform_14(%arg0: i32, %arg1: i32) -> (i32, i32) {
    %c0_i32 = arith.constant 0 : i32
    %c0_i32_0 = arith.constant 0 : i32
    %c0_i32_1 = arith.constant 0 : i32
    return %c0_i32, %c0_i32_0 : i32, i32
  }
  func.func @transform_15(%arg0: i32, %arg1: i32) -> (i32, i32) {
    %c0_i32 = arith.constant 0 : i32
    %c0_i32_0 = arith.constant 0 : i32
    %c0_i32_1 = arith.constant 0 : i32
    return %c0_i32, %c0_i32_0 : i32, i32
  }
  func.func @transform_16(%arg0: i32, %arg1: i32) -> (i32, i32) {
    %c0_i32 = arith.constant 0 : i32
    %c0_i32_0 = arith.constant 0 : i32
    %c0_i32_1 = arith.constant 0 : i32
    return %c0_i32, %c0_i32_0 : i32, i32
  }
  func.func @transform_17(%arg0: i32, %arg1: i32) -> (i32, i32) {
    %c0_i32 = arith.constant 0 : i32
    %c0_i32_0 = arith.constant 0 : i32
    %c0_i32_1 = arith.constant 0 : i32
    return %c0_i32, %c0_i32_0 : i32, i32
  }
  func.func @transform_18(%arg0: i32, %arg1: i32) -> (i32, i32, i32) {
    %c0_i32 = arith.constant 0 : i32
    %c0_i32_0 = arith.constant 0 : i32
    return %arg0, %arg1, %c0_i32 : i32, i32, i32
  }
  func.func @transform_19(%arg0: i32, %arg1: i32) -> (i32, i32, i32, i32) {
    %c0_i32 = arith.constant 0 : i32
    %c0_i32_0 = arith.constant 0 : i32
    %c0_i32_1 = arith.constant 0 : i32
    return %arg0, %c0_i32, %arg1, %c0_i32_0 : i32, i32, i32, i32
  }
}

</mosaic_0001>

<llo_original>
// kernel: tpu_custom_call.1
$region0: #{tpu_custom_call.1}
  #allocation0 [shape = 'u32[]', space=smem, size = 0x4, offset = 0x4, fixed_abs, tag = 'smem constant byte address 0x4 - core index']
  #allocation1 [shape = 'u32[72,128]{1,0:T(1,128)}', space=vmem, size = 0x9000, scoped, tag = 'internal scratch']
  #allocation2 [shape = 'bf16[4,8,8]{2,1,0:T(8,128)(2,1)}', space=vmem, size = 0x2000, scoped, tag = 'scratch operand']
  #allocation3 [shape = 'bf16[4,8,8]{2,1,0:T(8,128)(2,1)}', space=vmem, size = 0x2000, scoped, tag = 'scratch operand']
  %s0 = inlined_call_operand.vmem [shape: f32[2,8,32], index: 0, kind: input, shape index: {}]
  %s1 = inlined_call_operand.hbm [shape: bf16[2,8,32], index: 1, kind: input, shape index: {}]
  %s2 = inlined_call_operand.vmem [shape: bf16[32,32], index: 2, kind: input, shape index: {}]
  %s3 = inlined_call_operand.vmem [shape: f32[1,32], index: 3, kind: input, shape index: {}]
  %s4 = inlined_call_operand.vmem [shape: bf16[32,32], index: 4, kind: input, shape index: {}]
  %s5 = inlined_call_operand.vmem [shape: f32[1,32], index: 5, kind: input, shape index: {}]
  %s6 = inlined_call_operand.hbm [shape: bf16[32,32], index: 6, kind: input, shape index: {}]
  %s7 = inlined_call_operand.vmem [shape: f32[1,32], index: 7, kind: input, shape index: {}]
  %s8 = inlined_call_operand.hbm [shape: bf16[4,8,32], index: 8, kind: input, shape index: {}]
  %s9 = inlined_call_operand.vmem [shape: f32[1,32], index: 9, kind: input, shape index: {}]
  %s10 = inlined_call_operand.hbm [shape: bf16[32,64], index: 10, kind: input, shape index: {}]
  %s11 = inlined_call_operand.vmem [shape: f32[1,64], index: 11, kind: input, shape index: {}]
  %s12 = inlined_call_operand.vmem [shape: bf16[64,32], index: 12, kind: input, shape index: {}]
  %s13 = inlined_call_operand.vmem [shape: f32[1,32], index: 13, kind: input, shape index: {}]
  %s14 = inlined_call_operand.vmem [shape: f32[1,32], index: 14, kind: input, shape index: {}]
  %s15 = inlined_call_operand.vmem [shape: f32[1,32], index: 15, kind: input, shape index: {}]
  %s16 = inlined_call_operand.vmem [shape: f32[1,32], index: 16, kind: input, shape index: {}]
  %s17 = inlined_call_operand.vmem [shape: f32[1,32], index: 17, kind: input, shape index: {}]
  %s18 = inlined_call_operand.hbm [shape: f32[2,8,32], index: 18, kind: output, shape index: {0}]
  %s19 = inlined_call_operand.hbm [shape: f32[2,4,8,8], index: 19, kind: output, shape index: {1}]
  %20 = xla_tuple %s18, %s19
  %s21 = sld [smem:[#allocation0]]
  $region133: #{tpu_custom_call.1} parent=0
    _
  %s23 = ssub.s32 1, %s21
  %s24 = scalar_select 0, %s23, %s21
  $region1: #{tpu_custom_call.1} parent=0
    #allocation4 [shape = 'u8[4096]{0}', space=vmem, size = 0x1000, scoped, tag = 'input window, operand 1']
    #allocation5 [shape = 's32[2]{0}', space=sflag, size = 0x8, scoped, tag = 'scoped memory for tpu_custom_call.1']
    #allocation6 [shape = 's32[2]{0}', space=sflag, size = 0x8, scoped, tag = 'scoped memory for tpu_custom_call.1']
    #allocation7 [shape = 'u8[8192]{0}', space=vmem, size = 0x2000, scoped, tag = 'input window, operand 6, single buffered']
    #allocation8 [shape = 's32[1]{0}', space=sflag, size = 0x4, scoped, tag = 'scoped memory for tpu_custom_call.1']
    #allocation9 [shape = 'u8[8192]{0}', space=vmem, size = 0x2000, scoped, tag = 'input window, operand 8, single buffered']
    #allocation10 [shape = 'u8[8192]{0}', space=vmem, size = 0x2000, scoped, tag = 'input window, operand 10, single buffered']
    #allocation11 [shape = 's32[1]{0}', space=sflag, size = 0x4, scoped, tag = 'scoped memory for tpu_custom_call.1']
    #allocation12 [shape = 'u8[8192]{0}', space=vmem, size = 0x2000, scoped, tag = 'output window, operand 0']
    #allocation13 [shape = 'u8[32768]{0}', space=vmem, size = 0x8000, scoped, tag = 'output window, operand 1']
    #allocation14 [shape = 's32[2]{0}', space=sflag, size = 0x8, scoped, tag = 'scoped memory for tpu_custom_call.1']
    %25 = vsyncpa [#allocation5], 0
    %s26 = scalar_lea.sflag [#allocation5], 1
    %27 = vsyncpa %s26, 0
    %28 = vsyncpa [#allocation8], 0
    %29 = vsyncpa [#allocation11], 0
    %30 = vsyncpa [#allocation6], 0
    %s31 = scalar_lea.sflag [#allocation6], 1
    %32 = vsyncpa %s31, 0
    %33 = vsyncpa [#allocation14], 0
    %s34 = scalar_lea.sflag [#allocation14], 1
    %35 = vsyncpa %s34, 0
    loop: start=0, step=1, limit=4
    $region2: #{tpu_custom_call.1} parent=1 // loop_pre_header
      _
    $region3: #{tpu_custom_call.1} parent=1 // loop_header
      %s37 = sphi 0, %s41
      %p38 = scmp.ge.s32.totalorder %s37, 4
      %s44 = sphi 0, %s56
      %s45 = sphi 0, %s52
      %s46 = sphi 0, %s44
      %s47 = sphi 0, %s45
      %s48 = sphi 0, %s46
      %s49 = sphi 0, %s47
      %s61 = sphi 0, %s63
      %s64 = sphi 0, %s61
      %s65 = sphi 0, %s64
      %s81 = sphi 0, %s65
      %s87 = sphi 0, %s89
      %s90 = sphi 0, %s87
      %s91 = sphi 0, %s90
      %s107 = sphi 0, %s91
      %s111 = sphi 0, %s111
      %s113 = sphi 0, %s111
      %s114 = sphi 0, %s113
      %s128 = sphi 0, %s114
      %s132 = sphi 0, %s132
      %s134 = sphi 0, %s132
      %s135 = sphi 0, %s134
      %s149 = sphi 0, %s135
      %s153 = sphi 0, %s153
      %s155 = sphi 0, %s153
      %s156 = sphi 0, %s155
      %s170 = sphi 0, %s156
      %s174 = sphi 0, %s174
      %s176 = sphi 0, %s174
      %s177 = sphi 0, %s176
      %s191 = sphi 0, %s177
      %s195 = sphi 0, %s195
      %s197 = sphi 0, %s195
      %s198 = sphi 0, %s197
      %s212 = sphi 0, %s198
      %s216 = sphi 0, %s216
      %s218 = sphi 0, %s216
      %s219 = sphi 0, %s218
      %s233 = sphi 0, %s219
      %s237 = sphi 0, %s237
      %s239 = sphi 0, %s237
      %s240 = sphi 0, %s239
      %s254 = sphi 0, %s240
      %s258 = sphi 0, %s258
      %s260 = sphi 0, %s258
      %s261 = sphi 0, %s260
      %s275 = sphi 0, %s261
      %s279 = sphi 0, %s279
      %s281 = sphi 0, %s279
      %s282 = sphi 0, %s281
      %s296 = sphi 0, %s282
      %s300 = sphi 0, %s300
      %s302 = sphi 0, %s300
      %s303 = sphi 0, %s302
      %s317 = sphi 0, %s303
      %s321 = sphi 0, %s321
      %s323 = sphi 0, %s321
      %s324 = sphi 0, %s323
      %s338 = sphi 0, %s324
      %s342 = sphi 0, %s342
      %s344 = sphi 0, %s342
      %s345 = sphi 0, %s344
      %s359 = sphi 0, %s345
      %s363 = sphi 0, %s363
      %s365 = sphi 0, %s363
      %s366 = sphi 0, %s365
      %s380 = sphi 0, %s366
      %s384 = sphi 0, %s384
      %s386 = sphi 0, %s384
      %s387 = sphi 0, %s386
      %s401 = sphi 0, %s387
      %s405 = sphi 0, %s405
      %s407 = sphi 0, %s405
      %s408 = sphi 0, %s407
      %s422 = sphi 0, %s408
      %s426 = sphi 0, %s426
      %s428 = sphi 0, %s426
      %s429 = sphi 0, %s428
      %s443 = sphi 0, %s429
      %s451 = sphi 0, %s453
      %s454 = sphi 0, %s451
      %s455 = sphi 0, %s454
      %s471 = sphi 0, %s455
      %s479 = sphi 0, %s481
      %s482 = sphi 0, %s479
      %s483 = sphi 0, %s482
      %s499 = sphi 0, %s483
    $region4: #{tpu_custom_call.1} parent=1 // loop_header_branch
      %40 = sbr.rel (%p38) target = $region8
    $region5: #{tpu_custom_call.1} parent=1 // loop_body
      %s42 = ssub.s32 %s37, 1
      %s43 = ssub.s32 %s37, 2
      %s50 = sadd.s32 1, %s45
      %p51 = scmp.ge.s32.totalorder %s50, 1
      %s52 = scalar_select %p51, 0, %s50
      %s53 = sadd.s32 1, %s44
      %s54 = scalar_select %p51, %s53, %s44
      %p55 = scmp.ge.s32.totalorder %s54, 2
      %s56 = scalar_select %p55, 0, %s54
      %s57 = ssub.s32 %s44, %s56
      %s58 = ssub.s32 %s45, %s52
      %s59 = sor.u32 %s57, %s58
      %p60 = scmp.eq.s32.totalorder %s59, 0
      %s62 = sadd.s32 %s61, 1
      %s63 = scalar_select %p60, %s61, %s62
      %p66 = pneg %p60
      %p67 = scmp.eq.s32.totalorder %s37, 1
      %p68 = por %p66, %p67
      %p69 = scmp.ne.s32.totalorder %s61, %s64
      %p70 = scmp.eq.s32.totalorder %s37, 0
      %p71 = por %p69, %p70
      %p72 = scmp.ne.s32.totalorder %s61, %s64
      %p73 = scmp.eq.s32.totalorder %s42, 1
      %p74 = por %p72, %p73
      %p75 = scmp.ne.s32.totalorder %s64, %s65
      %p76 = scmp.eq.s32.totalorder %s42, 0
      %p77 = por %p75, %p76
      %p78 = scmp.ne.s32.totalorder %s64, %s65
      %p79 = scmp.eq.s32.totalorder %s43, 1
      %p80 = por %p78, %p79
      %p82 = scmp.ne.s32.totalorder %s65, %s81
      %p83 = scmp.eq.s32.totalorder %s43, 0
      %p84 = por %p82, %p83
      %s85 = ssub.s32 %s44, %s56
      %p86 = scmp.eq.s32.totalorder %s85, 0
      %s88 = sadd.s32 %s87, 1
      %s89 = scalar_select %p86, %s87, %s88
      %p92 = pneg %p86
      %p93 = scmp.eq.s32.totalorder %s37, 1
      %p94 = por %p92, %p93
      %p95 = scmp.ne.s32.totalorder %s87, %s90
      %p96 = scmp.eq.s32.totalorder %s37, 0
      %p97 = por %p95, %p96
      %p98 = scmp.ne.s32.totalorder %s87, %s90
      %p99 = scmp.eq.s32.totalorder %s42, 1
      %p100 = por %p98, %p99
      %p101 = scmp.ne.s32.totalorder %s90, %s91
      %p102 = scmp.eq.s32.totalorder %s42, 0
      %p103 = por %p101, %p102
      %p104 = scmp.ne.s32.totalorder %s90, %s91
      %p105 = scmp.eq.s32.totalorder %s43, 1
      %p106 = por %p104, %p105
      %p108 = scmp.ne.s32.totalorder %s91, %s107
      %p109 = scmp.eq.s32.totalorder %s43, 0
      %p110 = por %p108, %p109
      %s112 = sadd.s32 %s111, 1
      %p115 = scmp.eq.s32.totalorder %s37, 1
      %p116 = scmp.ne.s32.totalorder %s111, %s113
      %p117 = scmp.eq.s32.totalorder %s37, 0
      %p118 = por %p116, %p117
      %p119 = scmp.ne.s32.totalorder %s111, %s113
      %p120 = scmp.eq.s32.totalorder %s42, 1
      %p121 = por %p119, %p120
      %p122 = scmp.ne.s32.totalorder %s113, %s114
      %p123 = scmp.eq.s32.totalorder %s42, 0
      %p124 = por %p122, %p123
      %p125 = scmp.ne.s32.totalorder %s113, %s114
      %p126 = scmp.eq.s32.totalorder %s43, 1
      %p127 = por %p125, %p126
      %p129 = scmp.ne.s32.totalorder %s114, %s128
      %p130 = scmp.eq.s32.totalorder %s43, 0
      %p131 = por %p129, %p130
      %s133 = sadd.s32 %s132, 1
      %p136 = scmp.eq.s32.totalorder %s37, 1
      %p137 = scmp.ne.s32.totalorder %s132, %s134
      %p138 = scmp.eq.s32.totalorder %s37, 0
      %p139 = por %p137, %p138
      %p140 = scmp.ne.s32.totalorder %s132, %s134
      %p141 = scmp.eq.s32.totalorder %s42, 1
      %p142 = por %p140, %p141
      %p143 = scmp.ne.s32.totalorder %s134, %s135
      %p144 = scmp.eq.s32.totalorder %s42, 0
      %p145 = por %p143, %p144
      %p146 = scmp.ne.s32.totalorder %s134, %s135
      %p147 = scmp.eq.s32.totalorder %s43, 1
      %p148 = por %p146, %p147
      %p150 = scmp.ne.s32.totalorder %s135, %s149
      %p151 = scmp.eq.s32.totalorder %s43, 0
      %p152 = por %p150, %p151
      %s154 = sadd.s32 %s153, 1
      %p157 = scmp.eq.s32.totalorder %s37, 1
      %p158 = scmp.ne.s32.totalorder %s153, %s155
      %p159 = scmp.eq.s32.totalorder %s37, 0
      %p160 = por %p158, %p159
      %p161 = scmp.ne.s32.totalorder %s153, %s155
      %p162 = scmp.eq.s32.totalorder %s42, 1
      %p163 = por %p161, %p162
      %p164 = scmp.ne.s32.totalorder %s155, %s156
      %p165 = scmp.eq.s32.totalorder %s42, 0
      %p166 = por %p164, %p165
      %p167 = scmp.ne.s32.totalorder %s155, %s156
      %p168 = scmp.eq.s32.totalorder %s43, 1
      %p169 = por %p167, %p168
      %p171 = scmp.ne.s32.totalorder %s156, %s170
      %p172 = scmp.eq.s32.totalorder %s43, 0
      %p173 = por %p171, %p172
      %s175 = sadd.s32 %s174, 1
      %p178 = scmp.eq.s32.totalorder %s37, 1
      %p179 = scmp.ne.s32.totalorder %s174, %s176
      %p180 = scmp.eq.s32.totalorder %s37, 0
      %p181 = por %p179, %p180
      %p182 = scmp.ne.s32.totalorder %s174, %s176
      %p183 = scmp.eq.s32.totalorder %s42, 1
      %p184 = por %p182, %p183
      %p185 = scmp.ne.s32.totalorder %s176, %s177
      %p186 = scmp.eq.s32.totalorder %s42, 0
      %p187 = por %p185, %p186
      %p188 = scmp.ne.s32.totalorder %s176, %s177
      %p189 = scmp.eq.s32.totalorder %s43, 1
      %p190 = por %p188, %p189
      %p192 = scmp.ne.s32.totalorder %s177, %s191
      %p193 = scmp.eq.s32.totalorder %s43, 0
      %p194 = por %p192, %p193
      %s196 = sadd.s32 %s195, 1
      %p199 = scmp.eq.s32.totalorder %s37, 1
      %p200 = scmp.ne.s32.totalorder %s195, %s197
      %p201 = scmp.eq.s32.totalorder %s37, 0
      %p202 = por %p200, %p201
      %p203 = scmp.ne.s32.totalorder %s195, %s197
      %p204 = scmp.eq.s32.totalorder %s42, 1
      %p205 = por %p203, %p204
      %p206 = scmp.ne.s32.totalorder %s197, %s198
      %p207 = scmp.eq.s32.totalorder %s42, 0
      %p208 = por %p206, %p207
      %p209 = scmp.ne.s32.totalorder %s197, %s198
      %p210 = scmp.eq.s32.totalorder %s43, 1
      %p211 = por %p209, %p210
      %p213 = scmp.ne.s32.totalorder %s198, %s212
      %p214 = scmp.eq.s32.totalorder %s43, 0
      %p215 = por %p213, %p214
      %s217 = sadd.s32 %s216, 1
      %p220 = scmp.eq.s32.totalorder %s37, 1
      %p221 = scmp.ne.s32.totalorder %s216, %s218
      %p222 = scmp.eq.s32.totalorder %s37, 0
      %p223 = por %p221, %p222
      %p224 = scmp.ne.s32.totalorder %s216, %s218
      %p225 = scmp.eq.s32.totalorder %s42, 1
      %p226 = por %p224, %p225
      %p227 = scmp.ne.s32.totalorder %s218, %s219
      %p228 = scmp.eq.s32.totalorder %s42, 0
      %p229 = por %p227, %p228
      %p230 = scmp.ne.s32.totalorder %s218, %s219
      %p231 = scmp.eq.s32.totalorder %s43, 1
      %p232 = por %p230, %p231
      %p234 = scmp.ne.s32.totalorder %s219, %s233
      %p235 = scmp.eq.s32.totalorder %s43, 0
      %p236 = por %p234, %p235
      %s238 = sadd.s32 %s237, 1
      %p241 = scmp.eq.s32.totalorder %s37, 1
      %p242 = scmp.ne.s32.totalorder %s237, %s239
      %p243 = scmp.eq.s32.totalorder %s37, 0
      %p244 = por %p242, %p243
      %p245 = scmp.ne.s32.totalorder %s237, %s239
      %p246 = scmp.eq.s32.totalorder %s42, 1
      %p247 = por %p245, %p246
      %p248 = scmp.ne.s32.totalorder %s239, %s240
      %p249 = scmp.eq.s32.totalorder %s42, 0
      %p250 = por %p248, %p249
      %p251 = scmp.ne.s32.totalorder %s239, %s240
      %p252 = scmp.eq.s32.totalorder %s43, 1
      %p253 = por %p251, %p252
      %p255 = scmp.ne.s32.totalorder %s240, %s254
      %p256 = scmp.eq.s32.totalorder %s43, 0
      %p257 = por %p255, %p256
      %s259 = sadd.s32 %s258, 1
      %p262 = scmp.eq.s32.totalorder %s37, 1
      %p263 = scmp.ne.s32.totalorder %s258, %s260
      %p264 = scmp.eq.s32.totalorder %s37, 0
      %p265 = por %p263, %p264
      %p266 = scmp.ne.s32.totalorder %s258, %s260
      %p267 = scmp.eq.s32.totalorder %s42, 1
      %p268 = por %p266, %p267
      %p269 = scmp.ne.s32.totalorder %s260, %s261
      %p270 = scmp.eq.s32.totalorder %s42, 0
      %p271 = por %p269, %p270
      %p272 = scmp.ne.s32.totalorder %s260, %s261
      %p273 = scmp.eq.s32.totalorder %s43, 1
      %p274 = por %p272, %p273
      %p276 = scmp.ne.s32.totalorder %s261, %s275
      %p277 = scmp.eq.s32.totalorder %s43, 0
      %p278 = por %p276, %p277
      %s280 = sadd.s32 %s279, 1
      %p283 = scmp.eq.s32.totalorder %s37, 1
      %p284 = scmp.ne.s32.totalorder %s279, %s281
      %p285 = scmp.eq.s32.totalorder %s37, 0
      %p286 = por %p284, %p285
      %p287 = scmp.ne.s32.totalorder %s279, %s281
      %p288 = scmp.eq.s32.totalorder %s42, 1
      %p289 = por %p287, %p288
      %p290 = scmp.ne.s32.totalorder %s281, %s282
      %p291 = scmp.eq.s32.totalorder %s42, 0
      %p292 = por %p290, %p291
      %p293 = scmp.ne.s32.totalorder %s281, %s282
      %p294 = scmp.eq.s32.totalorder %s43, 1
      %p295 = por %p293, %p294
      %p297 = scmp.ne.s32.totalorder %s282, %s296
      %p298 = scmp.eq.s32.totalorder %s43, 0
      %p299 = por %p297, %p298
      %s301 = sadd.s32 %s300, 1
      %p304 = scmp.eq.s32.totalorder %s37, 1
      %p305 = scmp.ne.s32.totalorder %s300, %s302
      %p306 = scmp.eq.s32.totalorder %s37, 0
      %p307 = por %p305, %p306
      %p308 = scmp.ne.s32.totalorder %s300, %s302
      %p309 = scmp.eq.s32.totalorder %s42, 1
      %p310 = por %p308, %p309
      %p311 = scmp.ne.s32.totalorder %s302, %s303
      %p312 = scmp.eq.s32.totalorder %s42, 0
      %p313 = por %p311, %p312
      %p314 = scmp.ne.s32.totalorder %s302, %s303
      %p315 = scmp.eq.s32.totalorder %s43, 1
      %p316 = por %p314, %p315
      %p318 = scmp.ne.s32.totalorder %s303, %s317
      %p319 = scmp.eq.s32.totalorder %s43, 0
      %p320 = por %p318, %p319
      %s322 = sadd.s32 %s321, 1
      %p325 = scmp.eq.s32.totalorder %s37, 1
      %p326 = scmp.ne.s32.totalorder %s321, %s323
      %p327 = scmp.eq.s32.totalorder %s37, 0
      %p328 = por %p326, %p327
      %p329 = scmp.ne.s32.totalorder %s321, %s323
      %p330 = scmp.eq.s32.totalorder %s42, 1
      %p331 = por %p329, %p330
      %p332 = scmp.ne.s32.totalorder %s323, %s324
      %p333 = scmp.eq.s32.totalorder %s42, 0
      %p334 = por %p332, %p333
      %p335 = scmp.ne.s32.totalorder %s323, %s324
      %p336 = scmp.eq.s32.totalorder %s43, 1
      %p337 = por %p335, %p336
      %p339 = scmp.ne.s32.totalorder %s324, %s338
      %p340 = scmp.eq.s32.totalorder %s43, 0
      %p341 = por %p339, %p340
      %s343 = sadd.s32 %s342, 1
      %p346 = scmp.eq.s32.totalorder %s37, 1
      %p347 = scmp.ne.s32.totalorder %s342, %s344
      %p348 = scmp.eq.s32.totalorder %s37, 0
      %p349 = por %p347, %p348
      %p350 = scmp.ne.s32.totalorder %s342, %s344
      %p351 = scmp.eq.s32.totalorder %s42, 1
      %p352 = por %p350, %p351
      %p353 = scmp.ne.s32.totalorder %s344, %s345
      %p354 = scmp.eq.s32.totalorder %s42, 0
      %p355 = por %p353, %p354
      %p356 = scmp.ne.s32.totalorder %s344, %s345
      %p357 = scmp.eq.s32.totalorder %s43, 1
      %p358 = por %p356, %p357
      %p360 = scmp.ne.s32.totalorder %s345, %s359
      %p361 = scmp.eq.s32.totalorder %s43, 0
      %p362 = por %p360, %p361
      %s364 = sadd.s32 %s363, 1
      %p367 = scmp.eq.s32.totalorder %s37, 1
      %p368 = scmp.ne.s32.totalorder %s363, %s365
      %p369 = scmp.eq.s32.totalorder %s37, 0
      %p370 = por %p368, %p369
      %p371 = scmp.ne.s32.totalorder %s363, %s365
      %p372 = scmp.eq.s32.totalorder %s42, 1
      %p373 = por %p371, %p372
      %p374 = scmp.ne.s32.totalorder %s365, %s366
      %p375 = scmp.eq.s32.totalorder %s42, 0
      %p376 = por %p374, %p375
      %p377 = scmp.ne.s32.totalorder %s365, %s366
      %p378 = scmp.eq.s32.totalorder %s43, 1
      %p379 = por %p377, %p378
      %p381 = scmp.ne.s32.totalorder %s366, %s380
      %p382 = scmp.eq.s32.totalorder %s43, 0
      %p383 = por %p381, %p382
      %s385 = sadd.s32 %s384, 1
      %p388 = scmp.eq.s32.totalorder %s37, 1
      %p389 = scmp.ne.s32.totalorder %s384, %s386
      %p390 = scmp.eq.s32.totalorder %s37, 0
      %p391 = por %p389, %p390
      %p392 = scmp.ne.s32.totalorder %s384, %s386
      %p393 = scmp.eq.s32.totalorder %s42, 1
      %p394 = por %p392, %p393
      %p395 = scmp.ne.s32.totalorder %s386, %s387
      %p396 = scmp.eq.s32.totalorder %s42, 0
      %p397 = por %p395, %p396
      %p398 = scmp.ne.s32.totalorder %s386, %s387
      %p399 = scmp.eq.s32.totalorder %s43, 1
      %p400 = por %p398, %p399
      %p402 = scmp.ne.s32.totalorder %s387, %s401
      %p403 = scmp.eq.s32.totalorder %s43, 0
      %p404 = por %p402, %p403
      %s406 = sadd.s32 %s405, 1
      %p409 = scmp.eq.s32.totalorder %s37, 1
      %p410 = scmp.ne.s32.totalorder %s405, %s407
      %p411 = scmp.eq.s32.totalorder %s37, 0
      %p412 = por %p410, %p411
      %p413 = scmp.ne.s32.totalorder %s405, %s407
      %p414 = scmp.eq.s32.totalorder %s42, 1
      %p415 = por %p413, %p414
      %p416 = scmp.ne.s32.totalorder %s407, %s408
      %p417 = scmp.eq.s32.totalorder %s42, 0
      %p418 = por %p416, %p417
      %p419 = scmp.ne.s32.totalorder %s407, %s408
      %p420 = scmp.eq.s32.totalorder %s43, 1
      %p421 = por %p419, %p420
      %p423 = scmp.ne.s32.totalorder %s408, %s422
      %p424 = scmp.eq.s32.totalorder %s43, 0
      %p425 = por %p423, %p424
      %s427 = sadd.s32 %s426, 1
      %p430 = scmp.eq.s32.totalorder %s37, 1
      %p431 = scmp.ne.s32.totalorder %s426, %s428
      %p432 = scmp.eq.s32.totalorder %s37, 0
      %p433 = por %p431, %p432
      %p434 = scmp.ne.s32.totalorder %s426, %s428
      %p435 = scmp.eq.s32.totalorder %s42, 1
      %p436 = por %p434, %p435
      %p437 = scmp.ne.s32.totalorder %s428, %s429
      %p438 = scmp.eq.s32.totalorder %s42, 0
      %p439 = por %p437, %p438
      %p440 = scmp.ne.s32.totalorder %s428, %s429
      %p441 = scmp.eq.s32.totalorder %s43, 1
      %p442 = por %p440, %p441
      %p444 = scmp.ne.s32.totalorder %s429, %s443
      %p445 = scmp.eq.s32.totalorder %s43, 0
      %p446 = por %p444, %p445
      %s447 = ssub.s32 %s44, %s56
      %s448 = ssub.s32 %s45, %s52
      %s449 = sor.u32 %s447, %s448
      %p450 = scmp.eq.s32.totalorder %s449, 0
      %s452 = sadd.s32 %s451, 1
      %s453 = scalar_select %p450, %s451, %s452
      %p456 = pneg %p450
      %p457 = scmp.eq.s32.totalorder %s37, 1
      %p458 = por %p456, %p457
      %p459 = scmp.ne.s32.totalorder %s451, %s454
      %p460 = scmp.eq.s32.totalorder %s37, 0
      %p461 = por %p459, %p460
      %p462 = scmp.ne.s32.totalorder %s451, %s454
      %p463 = scmp.eq.s32.totalorder %s42, 1
      %p464 = por %p462, %p463
      %p465 = scmp.ne.s32.totalorder %s454, %s455
      %p466 = scmp.eq.s32.totalorder %s42, 0
      %p467 = por %p465, %p466
      %p468 = scmp.ne.s32.totalorder %s454, %s455
      %p469 = scmp.eq.s32.totalorder %s43, 1
      %p470 = por %p468, %p469
      %p472 = scmp.ne.s32.totalorder %s455, %s471
      %p473 = scmp.eq.s32.totalorder %s43, 0
      %p474 = por %p472, %p473
      %s475 = ssub.s32 %s44, %s56
      %s476 = ssub.s32 %s45, %s52
      %s477 = sor.u32 %s475, %s476
      %p478 = scmp.eq.s32.totalorder %s477, 0
      %s480 = sadd.s32 %s479, 1
      %s481 = scalar_select %p478, %s479, %s480
      %p484 = pneg %p478
      %p485 = scmp.eq.s32.totalorder %s37, 1
      %p486 = por %p484, %p485
      %p487 = scmp.ne.s32.totalorder %s479, %s482
      %p488 = scmp.eq.s32.totalorder %s37, 0
      %p489 = por %p487, %p488
      %p490 = scmp.ne.s32.totalorder %s479, %s482
      %p491 = scmp.eq.s32.totalorder %s42, 1
      %p492 = por %p490, %p491
      %p493 = scmp.ne.s32.totalorder %s482, %s483
      %p494 = scmp.eq.s32.totalorder %s42, 0
      %p495 = por %p493, %p494
      %p496 = scmp.ne.s32.totalorder %s482, %s483
      %p497 = scmp.eq.s32.totalorder %s43, 1
      %p498 = por %p496, %p497
      %p500 = scmp.ne.s32.totalorder %s483, %s499
      %p501 = scmp.eq.s32.totalorder %s43, 0
      %p502 = por %p500, %p501
      %p503 = scmp.le.s32.totalorder 1, %s37
      %p504 = scmp.lt.s32.totalorder %s37, 3
      %p505 = pnand %p503, %p504
      %p506 = pneg %p505
      // Predicated region
      $region9: #{tpu_custom_call.1} parent=5 // pred_check
        _
      $region10: #{tpu_custom_call.1} parent=5 // pred_check_branch
        %508 = sbr.rel (%p505) target = $region12
      $region11: #{tpu_custom_call.1} parent=5 // pred_region
        %s509 = ssub.s32 %s37, 1
        // Predicated region
        $region13: #{tpu_custom_call.1} parent=11 // pred_check
          %p510 = pneg %p124
        $region14: #{tpu_custom_call.1} parent=11 // pred_check_branch
          %512 = sbr.rel (%p510) target = $region16
        $region15: #{tpu_custom_call.1} parent=11 // pred_region
          _
        $region16: #{tpu_custom_call.1} parent=11 // pred_fallthru
          _
        // Predicated region
        $region17: #{tpu_custom_call.1} parent=11 // pred_check
          %p513 = pneg %p145
        $region18: #{tpu_custom_call.1} parent=11 // pred_check_branch
          %515 = sbr.rel (%p513) target = $region20
        $region19: #{tpu_custom_call.1} parent=11 // pred_region
          _
        $region20: #{tpu_custom_call.1} parent=11 // pred_fallthru
          _
        // Predicated region
        $region21: #{tpu_custom_call.1} parent=11 // pred_check
          %p516 = pneg %p166
        $region22: #{tpu_custom_call.1} parent=11 // pred_check_branch
          %518 = sbr.rel (%p516) target = $region24
        $region23: #{tpu_custom_call.1} parent=11 // pred_region
          _
        $region24: #{tpu_custom_call.1} parent=11 // pred_fallthru
          _
        // Predicated region
        $region25: #{tpu_custom_call.1} parent=11 // pred_check
          %p519 = pneg %p187
        $region26: #{tpu_custom_call.1} parent=11 // pred_check_branch
          %521 = sbr.rel (%p519) target = $region28
        $region27: #{tpu_custom_call.1} parent=11 // pred_region
          _
        $region28: #{tpu_custom_call.1} parent=11 // pred_fallthru
          _
        // Predicated region
        $region29: #{tpu_custom_call.1} parent=11 // pred_check
          %p522 = pneg %p208
        $region30: #{tpu_custom_call.1} parent=11 // pred_check_branch
          %524 = sbr.rel (%p522) target = $region32
        $region31: #{tpu_custom_call.1} parent=11 // pred_region
          %526 = vsyncadd [#allocation8], 0
          %s527 = sshll.u32 %s6, 4
          %s528 = int_to_ptr.hbm [resolvable:$true] %s527
          %s529 = sshll.u32 [#allocation7], 4
          %s530 = int_to_ptr.vmem [resolvable:$true] %s529
          %535 = dma.hbm_to_vmem [thread:$0]  %s528, 256, %s530, [#allocation8], 64, 64, 4
        $region32: #{tpu_custom_call.1} parent=11 // pred_fallthru
          _
        // Predicated region
        $region33: #{tpu_custom_call.1} parent=11 // pred_check
          %p536 = pneg %p229
        $region34: #{tpu_custom_call.1} parent=11 // pred_check_branch
          %538 = sbr.rel (%p536) target = $region36
        $region35: #{tpu_custom_call.1} parent=11 // pred_region
          _
        $region36: #{tpu_custom_call.1} parent=11 // pred_fallthru
          _
        // Predicated region
        $region37: #{tpu_custom_call.1} parent=11 // pred_check
          %p539 = pneg %p250
        $region38: #{tpu_custom_call.1} parent=11 // pred_check_branch
          %541 = sbr.rel (%p539) target = $region40
        $region39: #{tpu_custom_call.1} parent=11 // pred_region
          %543 = vsyncadd [#allocation8], 0
          %s544 = sshll.u32 %s8, 4
          %s545 = int_to_ptr.hbm [resolvable:$true] %s544
          %s546 = sshll.u32 [#allocation9], 4
          %s547 = int_to_ptr.vmem [resolvable:$true] %s546
          %552 = dma.hbm_to_vmem [thread:$0]  %s545, 256, %s547, [#allocation8], 64, 64, 4
        $region40: #{tpu_custom_call.1} parent=11 // pred_fallthru
          _
        // Predicated region
        $region41: #{tpu_custom_call.1} parent=11 // pred_check
          %p553 = pneg %p271
        $region42: #{tpu_custom_call.1} parent=11 // pred_check_branch
          %555 = sbr.rel (%p553) target = $region44
        $region43: #{tpu_custom_call.1} parent=11 // pred_region
          _
        $region44: #{tpu_custom_call.1} parent=11 // pred_fallthru
          _
        // Predicated region
        $region45: #{tpu_custom_call.1} parent=11 // pred_check
          %p556 = pneg %p292
        $region46: #{tpu_custom_call.1} parent=11 // pred_check_branch
          %558 = sbr.rel (%p556) target = $region48
        $region47: #{tpu_custom_call.1} parent=11 // pred_region
          %560 = vsyncadd [#allocation11], 0
          %s561 = sshll.u32 %s10, 4
          %s562 = int_to_ptr.hbm [resolvable:$true] %s561
          %s563 = sshll.u32 [#allocation10], 4
          %s564 = int_to_ptr.vmem [resolvable:$true] %s563
          %569 = dma.hbm_to_vmem [thread:$0]  %s562, 256, %s564, [#allocation11], 64, 64, 4
        $region48: #{tpu_custom_call.1} parent=11 // pred_fallthru
          _
        // Predicated region
        $region49: #{tpu_custom_call.1} parent=11 // pred_check
          %p570 = pneg %p313
        $region50: #{tpu_custom_call.1} parent=11 // pred_check_branch
          %572 = sbr.rel (%p570) target = $region52
        $region51: #{tpu_custom_call.1} parent=11 // pred_region
          _
        $region52: #{tpu_custom_call.1} parent=11 // pred_fallthru
          _
        // Predicated region
        $region53: #{tpu_custom_call.1} parent=11 // pred_check
          %p573 = pneg %p334
        $region54: #{tpu_custom_call.1} parent=11 // pred_check_branch
          %575 = sbr.rel (%p573) target = $region56
        $region55: #{tpu_custom_call.1} parent=11 // pred_region
          _
        $region56: #{tpu_custom_call.1} parent=11 // pred_fallthru
          _
        // Predicated region
        $region57: #{tpu_custom_call.1} parent=11 // pred_check
          %p576 = pneg %p355
        $region58: #{tpu_custom_call.1} parent=11 // pred_check_branch
          %578 = sbr.rel (%p576) target = $region60
        $region59: #{tpu_custom_call.1} parent=11 // pred_region
          _
        $region60: #{tpu_custom_call.1} parent=11 // pred_fallthru
          _
        // Predicated region
        $region61: #{tpu_custom_call.1} parent=11 // pred_check
          %p579 = pneg %p376
        $region62: #{tpu_custom_call.1} parent=11 // pred_check_branch
          %581 = sbr.rel (%p579) target = $region64
        $region63: #{tpu_custom_call.1} parent=11 // pred_region
          _
        $region64: #{tpu_custom_call.1} parent=11 // pred_fallthru
          _
        // Predicated region
        $region65: #{tpu_custom_call.1} parent=11 // pred_check
          %p582 = pneg %p397
        $region66: #{tpu_custom_call.1} parent=11 // pred_check_branch
          %584 = sbr.rel (%p582) target = $region68
        $region67: #{tpu_custom_call.1} parent=11 // pred_region
          _
        $region68: #{tpu_custom_call.1} parent=11 // pred_fallthru
          _
        // Predicated region
        $region69: #{tpu_custom_call.1} parent=11 // pred_check
          %p585 = pneg %p418
        $region70: #{tpu_custom_call.1} parent=11 // pred_check_branch
          %587 = sbr.rel (%p585) target = $region72
        $region71: #{tpu_custom_call.1} parent=11 // pred_region
          _
        $region72: #{tpu_custom_call.1} parent=11 // pred_fallthru
          _
        // Predicated region
        $region73: #{tpu_custom_call.1} parent=11 // pred_check
          %p588 = pneg %p439
        $region74: #{tpu_custom_call.1} parent=11 // pred_check_branch
          %590 = sbr.rel (%p588) target = $region76
        $region75: #{tpu_custom_call.1} parent=11 // pred_region
          _
        $region76: #{tpu_custom_call.1} parent=11 // pred_fallthru
          _
      $region12: #{tpu_custom_call.1} parent=5 // pred_fallthru
        _
      %p591 = scmp.lt.s32.totalorder %s37, 2
      // Predicated region
      $region77: #{tpu_custom_call.1} parent=5 // pred_check
        %p592 = pneg %p591
      $region78: #{tpu_custom_call.1} parent=5 // pred_check_branch
        %594 = sbr.rel (%p592) target = $region80
      $region79: #{tpu_custom_call.1} parent=5 // pred_region
        // Predicated region
        $region81: #{tpu_custom_call.1} parent=79 // pred_check
          %p595 = pneg %p71
        $region82: #{tpu_custom_call.1} parent=79 // pred_check_branch
          %597 = sbr.rel (%p595) target = $region84
        $region83: #{tpu_custom_call.1} parent=79 // pred_region
          %p598 = scmp.lt.s32.totalorder %s44, 1
          %s599 = scalar_select %p598, %s44, 1
          %p600 = scmp.lt.s32.totalorder %s45, 0
          %s601 = scalar_select %p600, %s45, 0
          %s602 = sadd.s32 %s601, %s599
          %s603 = smul.addr %s602, 8
          %s604 = scalar_lea.vmem %s0, %s603
        $region84: #{tpu_custom_call.1} parent=79 // pred_fallthru
          _
        // Predicated region
        $region85: #{tpu_custom_call.1} parent=79 // pred_check
          %p605 = pneg %p97
        $region86: #{tpu_custom_call.1} parent=79 // pred_check_branch
          %607 = sbr.rel (%p605) target = $region88
        $region87: #{tpu_custom_call.1} parent=79 // pred_region
          %s608 = sand.u32 %s87, 1
          %s609 = scalar_lea.sflag [#allocation5], %s608
          %s610 = sand.u32 %s87, 1
          %s611 = smul.addr %s610, 4
          %s612 = scalar_lea.vmem [#allocation4], %s611
          %614 = vsyncadd %s609, 0
          %s615 = smul.addr %s44, 4
          %s616 = scalar_lea.hbm %s1, %s615
          %s618 = sshll.u32 %s616, 4
          %s619 = int_to_ptr.hbm [resolvable:$true] %s618
          %s620 = sshll.u32 %s612, 4
          %s621 = int_to_ptr.vmem [resolvable:$true] %s620
          %623 = dma.hbm_to_vmem [thread:$0]  %s619, 64, %s621, %s609
        $region88: #{tpu_custom_call.1} parent=79 // pred_fallthru
          _
      $region80: #{tpu_custom_call.1} parent=5 // pred_fallthru
        _
      %p624 = scmp.le.s32.totalorder 1, %s37
      %p625 = scmp.lt.s32.totalorder %s37, 3
      %p626 = pnand %p624, %p625
      %p627 = pneg %p626
      // Predicated region
      $region89: #{tpu_custom_call.1} parent=5 // pred_check
        _
      $region90: #{tpu_custom_call.1} parent=5 // pred_check_branch
        %629 = sbr.rel (%p626) target = $region92
      $region91: #{tpu_custom_call.1} parent=5 // pred_region
        %s630 = ssub.s32 %s37, 1
        %s631 = sand.u32 %s90, 1
        %s632 = scalar_lea.sflag [#allocation5], %s631
        %s633 = sand.u32 %s90, 1
        %s634 = smul.addr %s633, 4
        %s635 = scalar_lea.vmem [#allocation4], %s634
        // Predicated region
        $region93: #{tpu_custom_call.1} parent=91 // pred_check
          %p636 = pneg %p103
        $region94: #{tpu_custom_call.1} parent=91 // pred_check_branch
          %638 = sbr.rel (%p636) target = $region96
        $region95: #{tpu_custom_call.1} parent=91 // pred_region
          %640 = dma.done %s632, 64
        $region96: #{tpu_custom_call.1} parent=91 // pred_fallthru
          _
        // Predicated region
        $region97: #{tpu_custom_call.1} parent=91 // pred_check
          %p641 = pneg %p208
        $region98: #{tpu_custom_call.1} parent=91 // pred_check_branch
          %643 = sbr.rel (%p641) target = $region100
        $region99: #{tpu_custom_call.1} parent=91 // pred_region
          %645 = dma.done [#allocation8], 256
        $region100: #{tpu_custom_call.1} parent=91 // pred_fallthru
          _
        // Predicated region
        $region101: #{tpu_custom_call.1} parent=91 // pred_check
          %p646 = pneg %p250
        $region102: #{tpu_custom_call.1} parent=91 // pred_check_branch
          %648 = sbr.rel (%p646) target = $region104
        $region103: #{tpu_custom_call.1} parent=91 // pred_region
          %650 = dma.done [#allocation8], 256
        $region104: #{tpu_custom_call.1} parent=91 // pred_fallthru
          _
        // Predicated region
        $region105: #{tpu_custom_call.1} parent=91 // pred_check
          %p651 = pneg %p292
        $region106: #{tpu_custom_call.1} parent=91 // pred_check_branch
          %653 = sbr.rel (%p651) target = $region108
        $region107: #{tpu_custom_call.1} parent=91 // pred_region
          %655 = dma.done [#allocation11], 256
        $region108: #{tpu_custom_call.1} parent=91 // pred_fallthru
          _
        %p656 = scmp.lt.s32.totalorder %s46, 1
        %s657 = scalar_select %p656, %s46, 1
        %p658 = scmp.lt.s32.totalorder %s47, 0
        %s659 = scalar_select %p658, %s47, 0
        %s660 = sadd.s32 %s659, %s657
        %s661 = smul.addr %s660, 8
        %s662 = scalar_lea.vmem %s0, %s661
        %p663 = pneg %p77
        %p664 = pneg %p74
        %s665 = sand.u32 %s90, 1
        %s666 = scalar_lea.sflag [#allocation5], %s665
        %s667 = sand.u32 %s90, 1
        %s668 = smul.addr %s667, 4
        %s669 = scalar_lea.vmem [#allocation4], %s668
        %p670 = pneg %p103
        %p671 = pneg %p100
        %p672 = pneg %p124
        %p673 = pneg %p121
        %p674 = pneg %p145
        %p675 = pneg %p142
        %p676 = pneg %p166
        %p677 = pneg %p163
        %p678 = pneg %p187
        %p679 = pneg %p184
        %p680 = pneg %p208
        %p681 = pneg %p205
        %p682 = pneg %p229
        %p683 = pneg %p226
        %p684 = pneg %p250
        %p685 = pneg %p247
        %p686 = pneg %p271
        %p687 = pneg %p268
        %p688 = pneg %p292
        %p689 = pneg %p289
        %p690 = pneg %p313
        %p691 = pneg %p310
        %p692 = pneg %p334
        %p693 = pneg %p331
        %p694 = pneg %p355
        %p695 = pneg %p352
        %p696 = pneg %p376
        %p697 = pneg %p373
        %p698 = pneg %p397
        %p699 = pneg %p394
        %p700 = pneg %p418
        %p701 = pneg %p415
        %p702 = pneg %p439
        %p703 = pneg %p436
        %p704 = pneg %p467
        %p705 = pneg %p464
        %s706 = sand.u32 %s454, 1
        %s707 = scalar_lea.sflag [#allocation6], %s706
        %s708 = sand.u32 %s454, 1
        %s709 = smul.addr %s708, 8
        %s710 = scalar_lea.vmem [#allocation12], %s709
        %p711 = pneg %p495
        %p712 = pneg %p492
        %s713 = sand.u32 %s482, 1
        %s714 = scalar_lea.sflag [#allocation14], %s713
        %s715 = sand.u32 %s482, 1
        %s716 = smul.addr %s715, 32
        %s717 = scalar_lea.vmem [#allocation13], %s716
        %p718 = scmp.lt.s32.totalorder %s46, 1
        %s719 = scalar_select %p718, %s46, 1
        %p720 = scmp.lt.s32.totalorder %s47, 0
        %s721 = scalar_select %p720, %s47, 0
        %s722 = sadd.s32 %s721, %s719
        %s723 = smul.addr %s722, 8
        %s724 = scalar_lea.vmem %s0, %s723
        %v726 = vld [vmem:[%s724] sm:$0xff]
        %p727 = scmp.eq.s32.totalorder %s47, 0
        // Predicated region
        $region109: #{tpu_custom_call.1} parent=91 // pred_check
          %p728 = pneg %p727
        $region110: #{tpu_custom_call.1} parent=91 // pred_check_branch
          %730 = sbr.rel (%p728) target = $region112
        $region111: #{tpu_custom_call.1} parent=91 // pred_region
          %v731 = vld [vmem:[%s635] sm:$0xf]
          %v732 = vld [vmem:[%s4] sm:$0xf]
          %v733 = vld [vmem:[%s4 + $0x4] sm:$0xf]
          %v734 = vld [vmem:[%s4 + $0x8] sm:$0xf]
          %v735 = vld [vmem:[%s4 + $0xc] sm:$0xf]
          %v736 = vld [vmem:[%s5] sm:$0x1]
          %v738 = vperm.slane %v736, 0
          %v744 = vunpack.c.l.b16 %v732
          %v745 = vunpack.c.l.b16 %v733
          %v746 = vunpack.c.l.b16 %v734
          %v747 = vunpack.c.l.b16 %v735
          %v748 = vpack.c.b16 %v745, %v744
          %v749 = vpack.c.b16 %v747, %v746
          %vm752 = vcmask 261120
          %v754 = vsel %vm752, %v731, 0
          %756 = vmatpush.bf16.msra.mxu0 0
          %757 = vmatpush.bf16.msra.mxu0 0
          %758 = vmatpush.bf16.msra.mxu0 0
          %759 = vmatpush.bf16.msra.mxu0 0
          %760 = vmatpush.bf16.msra.mxu0 0
          %761 = vmatpush.bf16.msra.mxu0 0
          %762 = vmatpush.bf16.msra.mxu0 %v749
          %763 = vmatpush.bf16.msra.mxu0 %v748
          %764 = vmatmul.bf16.gmra.mxu0 %v754
          %v765 = vpop.f32.mrf.mxu0
          %v766 = vadd.f32 %v738, %v765
          %v767 = vpop.f32.mrf.mxu0
          %768 = vdwg.mxu0
          %v769 = vld [vmem:[#allocation7] sm:$0xf]
          %v770 = vld [vmem:[#allocation7 + $0x4] sm:$0xf]
          %v771 = vld [vmem:[#allocation7 + $0x8] sm:$0xf]
          %v772 = vld [vmem:[#allocation7 + $0xc] sm:$0xf]
          %v773 = vld [vmem:[%s7] sm:$0x1]
          %v775 = vperm.slane %v773, 0
          %v781 = vunpack.c.l.b16 %v769
          %v782 = vunpack.c.l.b16 %v770
          %v783 = vunpack.c.l.b16 %v771
          %v784 = vunpack.c.l.b16 %v772
          %v785 = vpack.c.b16 %v782, %v781
          %v786 = vpack.c.b16 %v784, %v783
          %789 = vmatpush.bf16.msra.mxu0 0
          %790 = vmatpush.bf16.msra.mxu0 0
          %791 = vmatpush.bf16.msra.mxu0 0
          %792 = vmatpush.bf16.msra.mxu0 0
          %793 = vmatpush.bf16.msra.mxu0 0
          %794 = vmatpush.bf16.msra.mxu0 0
          %795 = vmatpush.bf16.msra.mxu0 %v786
          %796 = vmatpush.bf16.msra.mxu0 %v785
          %797 = vmatmul.bf16.gmra.mxu0 %v754
          %v798 = vpop.f32.mrf.mxu0
          %v799 = vadd.f32 %v775, %v798
          %v800 = vpop.f32.mrf.mxu0
          %801 = vdwg.mxu0
          %802 = vxpose.xlu0.b32.start [1/16] %v766, 128
          %803 = vxpose.xlu0.b32.cont [2/16] 0.0, 128
          %804 = vxpose.xlu0.b32.cont [3/16] 0.0, 128
          %805 = vxpose.xlu0.b32.cont [4/16] 0.0, 128
          %806 = vxpose.xlu0.b32.cont [5/16] 0.0, 128
          %807 = vxpose.xlu0.b32.cont [6/16] 0.0, 128
          %808 = vxpose.xlu0.b32.cont [7/16] 0.0, 128
          %809 = vxpose.xlu0.b32.cont [8/16] 0.0, 128
          %810 = vxpose.xlu0.b32.cont [9/16] 0.0, 128
          %811 = vxpose.xlu0.b32.cont [10/16] 0.0, 128
          %812 = vxpose.xlu0.b32.cont [11/16] 0.0, 128
          %813 = vxpose.xlu0.b32.cont [12/16] 0.0, 128
          %814 = vxpose.xlu0.b32.cont [13/16] 0.0, 128
          %815 = vxpose.xlu0.b32.cont [14/16] 0.0, 128
          %816 = vxpose.xlu0.b32.cont [15/16] 0.0, 128
          %817 = vxpose.xlu0.b32.end [16/16] 0.0, 128
          %v818 = vpop.trf.xlu0
          %v819 = vpop.trf.xlu0
          %v820 = vpop.trf.xlu0
          %v821 = vpop.trf.xlu0
          %v822 = vpop.trf.xlu0
          %v823 = vpop.trf.xlu0
          %v824 = vpop.trf.xlu0
          %v825 = vpop.trf.xlu0
          %v826 = vpop.trf.xlu0
          %v827 = vpop.trf.xlu0
          %v828 = vpop.trf.xlu0
          %v829 = vpop.trf.xlu0
          %v830 = vpop.trf.xlu0
          %v831 = vpop.trf.xlu0
          %v832 = vpop.trf.xlu0
          %v833 = vpop.trf.xlu0
          %v834 = vpack.c.bf16 %v818, %v818
          %v835 = vpack.c.bf16 %v819, %v819
          %v836 = vpack.c.bf16 %v820, %v820
          %v837 = vpack.c.bf16 %v821, %v821
          %vm838 = vcmask 60416
          %839 = vst.msk [vmem:[#allocation2] sm:$0xf] %vm838, %v834
          %840 = vst.msk [vmem:[#allocation2 + $0x4] sm:$0xf] %vm838, %v835
          %841 = vst.msk [vmem:[#allocation2 + $0x8] sm:$0xf] %vm838, %v836
          %842 = vst.msk [vmem:[#allocation2 + $0xc] sm:$0xf] %vm838, %v837
          %843 = vxpose.xlu0.b32.start [1/16] %v799, 128
          %844 = vxpose.xlu0.b32.cont [2/16] 0.0, 128
          %845 = vxpose.xlu0.b32.cont [3/16] 0.0, 128
          %846 = vxpose.xlu0.b32.cont [4/16] 0.0, 128
          %847 = vxpose.xlu0.b32.cont [5/16] 0.0, 128
          %848 = vxpose.xlu0.b32.cont [6/16] 0.0, 128
          %849 = vxpose.xlu0.b32.cont [7/16] 0.0, 128
          %850 = vxpose.xlu0.b32.cont [8/16] 0.0, 128
          %851 = vxpose.xlu0.b32.cont [9/16] 0.0, 128
          %852 = vxpose.xlu0.b32.cont [10/16] 0.0, 128
          %853 = vxpose.xlu0.b32.cont [11/16] 0.0, 128
          %854 = vxpose.xlu0.b32.cont [12/16] 0.0, 128
          %855 = vxpose.xlu0.b32.cont [13/16] 0.0, 128
          %856 = vxpose.xlu0.b32.cont [14/16] 0.0, 128
          %857 = vxpose.xlu0.b32.cont [15/16] 0.0, 128
          %858 = vxpose.xlu0.b32.end [16/16] 0.0, 128
          %v859 = vpop.trf.xlu0
          %v860 = vpop.trf.xlu0
          %v861 = vpop.trf.xlu0
          %v862 = vpop.trf.xlu0
          %v863 = vpop.trf.xlu0
          %v864 = vpop.trf.xlu0
          %v865 = vpop.trf.xlu0
          %v866 = vpop.trf.xlu0
          %v867 = vpop.trf.xlu0
          %v868 = vpop.trf.xlu0
          %v869 = vpop.trf.xlu0
          %v870 = vpop.trf.xlu0
          %v871 = vpop.trf.xlu0
          %v872 = vpop.trf.xlu0
          %v873 = vpop.trf.xlu0
          %v874 = vpop.trf.xlu0
          %875 = vxpose.xlu0.b32.start [1/16] %v859, 128
          %876 = vxpose.xlu0.b32.cont [2/16] 0.0, 128
          %877 = vxpose.xlu0.b32.cont [3/16] 0.0, 128
          %878 = vxpose.xlu0.b32.cont [4/16] 0.0, 128
          %879 = vxpose.xlu0.b32.cont [5/16] 0.0, 128
          %880 = vxpose.xlu0.b32.cont [6/16] 0.0, 128
          %881 = vxpose.xlu0.b32.cont [7/16] 0.0, 128
          %882 = vxpose.xlu0.b32.cont [8/16] 0.0, 128
          %883 = vxpose.xlu0.b32.cont [9/16] 0.0, 128
          %884 = vxpose.xlu0.b32.cont [10/16] 0.0, 128
          %885 = vxpose.xlu0.b32.cont [11/16] 0.0, 128
          %886 = vxpose.xlu0.b32.cont [12/16] 0.0, 128
          %887 = vxpose.xlu0.b32.cont [13/16] 0.0, 128
          %888 = vxpose.xlu0.b32.cont [14/16] 0.0, 128
          %889 = vxpose.xlu0.b32.cont [15/16] 0.0, 128
          %890 = vxpose.xlu0.b32.end [16/16] 0.0, 128
          %v891 = vpop.trf.xlu0
          %v892 = vpop.trf.xlu0
          %v893 = vpop.trf.xlu0
          %v894 = vpop.trf.xlu0
          %v895 = vpop.trf.xlu0
          %v896 = vpop.trf.xlu0
          %v897 = vpop.trf.xlu0
          %v898 = vpop.trf.xlu0
          %v899 = vpop.trf.xlu0
          %v900 = vpop.trf.xlu0
          %v901 = vpop.trf.xlu0
          %v902 = vpop.trf.xlu0
          %v903 = vpop.trf.xlu0
          %v904 = vpop.trf.xlu0
          %v905 = vpop.trf.xlu0
          %v906 = vpop.trf.xlu0
          %907 = vxpose.xlu0.b32.start [1/16] %v860, 128
          %908 = vxpose.xlu0.b32.cont [2/16] 0.0, 128
          %909 = vxpose.xlu0.b32.cont [3/16] 0.0, 128
          %910 = vxpose.xlu0.b32.cont [4/16] 0.0, 128
          %911 = vxpose.xlu0.b32.cont [5/16] 0.0, 128
          %912 = vxpose.xlu0.b32.cont [6/16] 0.0, 128
          %913 = vxpose.xlu0.b32.cont [7/16] 0.0, 128
          %914 = vxpose.xlu0.b32.cont [8/16] 0.0, 128
          %915 = vxpose.xlu0.b32.cont [9/16] 0.0, 128
          %916 = vxpose.xlu0.b32.cont [10/16] 0.0, 128
          %917 = vxpose.xlu0.b32.cont [11/16] 0.0, 128
          %918 = vxpose.xlu0.b32.cont [12/16] 0.0, 128
          %919 = vxpose.xlu0.b32.cont [13/16] 0.0, 128
          %920 = vxpose.xlu0.b32.cont [14/16] 0.0, 128
          %921 = vxpose.xlu0.b32.cont [15/16] 0.0, 128
          %922 = vxpose.xlu0.b32.end [16/16] 0.0, 128
          %v923 = vpop.trf.xlu0
          %v924 = vpop.trf.xlu0
          %v925 = vpop.trf.xlu0
          %v926 = vpop.trf.xlu0
          %v927 = vpop.trf.xlu0
          %v928 = vpop.trf.xlu0
          %v929 = vpop.trf.xlu0
          %v930 = vpop.trf.xlu0
          %v931 = vpop.trf.xlu0
          %v932 = vpop.trf.xlu0
          %v933 = vpop.trf.xlu0
          %v934 = vpop.trf.xlu0
          %v935 = vpop.trf.xlu0
          %v936 = vpop.trf.xlu0
          %v937 = vpop.trf.xlu0
          %v938 = vpop.trf.xlu0
          %939 = vxpose.xlu0.b32.start [1/16] %v861, 128
          %940 = vxpose.xlu0.b32.cont [2/16] 0.0, 128
          %941 = vxpose.xlu0.b32.cont [3/16] 0.0, 128
          %942 = vxpose.xlu0.b32.cont [4/16] 0.0, 128
          %943 = vxpose.xlu0.b32.cont [5/16] 0.0, 128
          %944 = vxpose.xlu0.b32.cont [6/16] 0.0, 128
          %945 = vxpose.xlu0.b32.cont [7/16] 0.0, 128
          %946 = vxpose.xlu0.b32.cont [8/16] 0.0, 128
          %947 = vxpose.xlu0.b32.cont [9/16] 0.0, 128
          %948 = vxpose.xlu0.b32.cont [10/16] 0.0, 128
          %949 = vxpose.xlu0.b32.cont [11/16] 0.0, 128
          %950 = vxpose.xlu0.b32.cont [12/16] 0.0, 128
          %951 = vxpose.xlu0.b32.cont [13/16] 0.0, 128
          %952 = vxpose.xlu0.b32.cont [14/16] 0.0, 128
          %953 = vxpose.xlu0.b32.cont [15/16] 0.0, 128
          %954 = vxpose.xlu0.b32.end [16/16] 0.0, 128
          %v955 = vpop.trf.xlu0
          %v956 = vpop.trf.xlu0
          %v957 = vpop.trf.xlu0
          %v958 = vpop.trf.xlu0
          %v959 = vpop.trf.xlu0
          %v960 = vpop.trf.xlu0
          %v961 = vpop.trf.xlu0
          %v962 = vpop.trf.xlu0
          %v963 = vpop.trf.xlu0
          %v964 = vpop.trf.xlu0
          %v965 = vpop.trf.xlu0
          %v966 = vpop.trf.xlu0
          %v967 = vpop.trf.xlu0
          %v968 = vpop.trf.xlu0
          %v969 = vpop.trf.xlu0
          %v970 = vpop.trf.xlu0
          %971 = vxpose.xlu0.b32.start [1/16] %v862, 128
          %972 = vxpose.xlu0.b32.cont [2/16] 0.0, 128
          %973 = vxpose.xlu0.b32.cont [3/16] 0.0, 128
          %974 = vxpose.xlu0.b32.cont [4/16] 0.0, 128
          %975 = vxpose.xlu0.b32.cont [5/16] 0.0, 128
          %976 = vxpose.xlu0.b32.cont [6/16] 0.0, 128
          %977 = vxpose.xlu0.b32.cont [7/16] 0.0, 128
          %978 = vxpose.xlu0.b32.cont [8/16] 0.0, 128
          %979 = vxpose.xlu0.b32.cont [9/16] 0.0, 128
          %980 = vxpose.xlu0.b32.cont [10/16] 0.0, 128
          %981 = vxpose.xlu0.b32.cont [11/16] 0.0, 128
          %982 = vxpose.xlu0.b32.cont [12/16] 0.0, 128
          %983 = vxpose.xlu0.b32.cont [13/16] 0.0, 128
          %984 = vxpose.xlu0.b32.cont [14/16] 0.0, 128
          %985 = vxpose.xlu0.b32.cont [15/16] 0.0, 128
          %986 = vxpose.xlu0.b32.end [16/16] 0.0, 128
          %v987 = vpop.trf.xlu0
          %v988 = vpop.trf.xlu0
          %v989 = vpop.trf.xlu0
          %v990 = vpop.trf.xlu0
          %v991 = vpop.trf.xlu0
          %v992 = vpop.trf.xlu0
          %v993 = vpop.trf.xlu0
          %v994 = vpop.trf.xlu0
          %v995 = vpop.trf.xlu0
          %v996 = vpop.trf.xlu0
          %v997 = vpop.trf.xlu0
          %v998 = vpop.trf.xlu0
          %v999 = vpop.trf.xlu0
          %v1000 = vpop.trf.xlu0
          %v1001 = vpop.trf.xlu0
          %v1002 = vpop.trf.xlu0
          %v1003 = vpack.c.bf16 %v891, %v891
          %v1004 = vpack.c.bf16 %v923, %v923
          %v1005 = vpack.c.bf16 %v955, %v955
          %v1006 = vpack.c.bf16 %v987, %v987
          %1007 = vst.msk [vmem:[#allocation3] sm:$0xf] %vm838, %v1003
          %1008 = vst.msk [vmem:[#allocation3 + $0x4] sm:$0xf] %vm838, %v1004
          %1009 = vst.msk [vmem:[#allocation3 + $0x8] sm:$0xf] %vm838, %v1005
          %1010 = vst.msk [vmem:[#allocation3 + $0xc] sm:$0xf] %vm838, %v1006
        $region112: #{tpu_custom_call.1} parent=91 // pred_fallthru
          _
        %v1011 = vld [vmem:[%s14] sm:$0x1]
        %v1012 = vld [vmem:[%s15] sm:$0x1]
        %vm1013 = vcmask 261120
        %v1014 = vsel %vm1013, %v726, 0.0
        %1015 = vadd.xlane.f32.xlu0 %v1014
        %v1016 = vpop.xlane.xlu0 %1015
        %v1017 = vrcp.pop 32.0
        %v1018 = vmul.f32 32.0, %v1017
        %v1019 = vsub.f32 1.0, %v1018
        %v1020 = vmul.f32 %v1017, %v1019
        %v1021 = vadd.f32 %v1017, %v1020
        %vm1022 = vweird.f32 %v1017
        %v1023 = vsel %vm1022, %v1017, %v1021
        %v1024 = vmul.f32 %v1016, %v1023
        %v1025 = vsub.f32 %v726, %v1024
        %v1026 = vmul.f32 %v1025, %v1025
        %v1027 = vsel %vm1013, %v1026, 0.0
        %1028 = vadd.xlane.f32.xlu0 %v1027
        %v1029 = vpop.xlane.xlu0 %1028
        %v1030 = vmul.f32 %v1029, 0.032258064
        %v1031 = vrsqrt.pop %v1030
        %v1032 = vmul.f32 %v1031, %v1030
        %v1033 = vmul.f32 %v1032, %v1031
        %v1034 = vmul.f32 0.5, %v1033
        %v1035 = vsub.f32 1.5, %v1034
        %v1036 = vmul.f32 %v1031, %v1035
        %v1037 = vmul.f32 %v1030, %v1036
        %vm1038 = vcmp.eq.f32.partialorder %v1030, inf
        %v1039 = vsel %vm1038, %v1030, %v1037
        %vm1040 = vcmp.eq.f32.partialorder %v1030, 0.0
        %v1041 = vand.u32 %v1030, 2147483648
        %v1042 = vsel %vm1040, %v1041, %v1039
        %v1043 = vadd.f32 %v1042, 1e-06
        %v1044 = vrcp.pop %v1043
        %v1045 = vmul.f32 %v1043, %v1044
        %v1046 = vsub.f32 1.0, %v1045
        %v1047 = vmul.f32 %v1044, %v1046
        %v1048 = vadd.f32 %v1044, %v1047
        %vm1049 = vweird.f32 %v1043
        %vm1050 = vweird.f32 %v1044
        %vm1051 = vmor %vm1049, %vm1050
        %v1052 = vsel %vm1051, %v1044, %v1048
        %v1053 = vand.u32 2147483647, %v1043
        %vm1054 = vcmp.eq.f32.partialorder %v1053, 8.507059e+37
        %v1055 = vand.u32 %v1043, 2147483648
        %v1056 = vor.u32 1.1754944e-38, %v1055
        %v1057 = vsel %vm1054, %v1056, %v1052
        %v1058 = vmul.f32 %v1025, %v1057
        %v1060 = vperm.slane %v1011, 0
        %v1062 = vmul.f32 %v1060, %v1058
        %v1064 = vperm.slane %v1012, 0
        %v1066 = vadd.f32 %v1062, %v1064
        %v1067 = vpack.c.bf16 %v1066, %v1066
        %v1068 = vld [vmem:[%s2] sm:$0xf]
        %v1069 = vld [vmem:[%s2 + $0x4] sm:$0xf]
        %v1070 = vld [vmem:[%s2 + $0x8] sm:$0xf]
        %v1071 = vld [vmem:[%s2 + $0xc] sm:$0xf]
        %v1072 = vld [vmem:[%s3] sm:$0x1]
        %v1074 = vperm.slane %v1072, 0
        %v1080 = vunpack.c.l.b16 %v1068
        %v1081 = vunpack.c.l.b16 %v1069
        %v1082 = vunpack.c.l.b16 %v1070
        %v1083 = vunpack.c.l.b16 %v1071
        %v1084 = vpack.c.b16 %v1081, %v1080
        %v1085 = vpack.c.b16 %v1083, %v1082
        %v1089 = vsel %vm1013, %v1067, 0
        %1091 = vmatpush.bf16.msra.mxu0 0
        %1092 = vmatpush.bf16.msra.mxu0 0
        %1093 = vmatpush.bf16.msra.mxu0 0
        %1094 = vmatpush.bf16.msra.mxu0 0
        %1095 = vmatpush.bf16.msra.mxu0 0
        %1096 = vmatpush.bf16.msra.mxu0 0
        %1097 = vmatpush.bf16.msra.mxu0 %v1085
        %1098 = vmatpush.bf16.msra.mxu0 %v1084
        %1099 = vmatmul.bf16.gmra.mxu0 %v1089
        %v1100 = vpop.f32.mrf.mxu0
        %v1101 = vadd.f32 %v1074, %v1100
        %v1102 = vpop.f32.mrf.mxu0
        %1103 = vdwg.mxu0
        %1104 = vxpose.xlu0.b32.start [1/16] %v1101, 128
        %1105 = vxpose.xlu0.b32.cont [2/16] 0.0, 128
        %1106 = vxpose.xlu0.b32.cont [3/16] 0.0, 128
        %1107 = vxpose.xlu0.b32.cont [4/16] 0.0, 128
        %1108 = vxpose.xlu0.b32.cont [5/16] 0.0, 128
        %1109 = vxpose.xlu0.b32.cont [6/16] 0.0, 128
        %1110 = vxpose.xlu0.b32.cont [7/16] 0.0, 128
        %1111 = vxpose.xlu0.b32.cont [8/16] 0.0, 128
        %1112 = vxpose.xlu0.b32.cont [9/16] 0.0, 128
        %1113 = vxpose.xlu0.b32.cont [10/16] 0.0, 128
        %1114 = vxpose.xlu0.b32.cont [11/16] 0.0, 128
        %1115 = vxpose.xlu0.b32.cont [12/16] 0.0, 128
        %1116 = vxpose.xlu0.b32.cont [13/16] 0.0, 128
        %1117 = vxpose.xlu0.b32.cont [14/16] 0.0, 128
        %1118 = vxpose.xlu0.b32.cont [15/16] 0.0, 128
        %1119 = vxpose.xlu0.b32.end [16/16] 0.0, 128
        %v1120 = vpop.trf.xlu0
        %v1121 = vpop.trf.xlu0
        %v1122 = vpop.trf.xlu0
        %v1123 = vpop.trf.xlu0
        %v1124 = vpop.trf.xlu0
        %v1125 = vpop.trf.xlu0
        %v1126 = vpop.trf.xlu0
        %v1127 = vpop.trf.xlu0
        %v1128 = vpop.trf.xlu0
        %v1129 = vpop.trf.xlu0
        %v1130 = vpop.trf.xlu0
        %v1131 = vpop.trf.xlu0
        %v1132 = vpop.trf.xlu0
        %v1133 = vpop.trf.xlu0
        %v1134 = vpop.trf.xlu0
        %v1135 = vpop.trf.xlu0
        %1136 = vxpose.xlu0.b32.start [1/16] %v1120, 128
        %1137 = vxpose.xlu0.b32.cont [2/16] 0.0, 128
        %1138 = vxpose.xlu0.b32.cont [3/16] 0.0, 128
        %1139 = vxpose.xlu0.b32.cont [4/16] 0.0, 128
        %1140 = vxpose.xlu0.b32.cont [5/16] 0.0, 128
        %1141 = vxpose.xlu0.b32.cont [6/16] 0.0, 128
        %1142 = vxpose.xlu0.b32.cont [7/16] 0.0, 128
        %1143 = vxpose.xlu0.b32.cont [8/16] 0.0, 128
        %1144 = vxpose.xlu0.b32.cont [9/16] 0.0, 128
        %1145 = vxpose.xlu0.b32.cont [10/16] 0.0, 128
        %1146 = vxpose.xlu0.b32.cont [11/16] 0.0, 128
        %1147 = vxpose.xlu0.b32.cont [12/16] 0.0, 128
        %1148 = vxpose.xlu0.b32.cont [13/16] 0.0, 128
        %1149 = vxpose.xlu0.b32.cont [14/16] 0.0, 128
        %1150 = vxpose.xlu0.b32.cont [15/16] 0.0, 128
        %1151 = vxpose.xlu0.b32.end [16/16] 0.0, 128
        %v1152 = vpop.trf.xlu0
        %v1153 = vpop.trf.xlu0
        %v1154 = vpop.trf.xlu0
        %v1155 = vpop.trf.xlu0
        %v1156 = vpop.trf.xlu0
        %v1157 = vpop.trf.xlu0
        %v1158 = vpop.trf.xlu0
        %v1159 = vpop.trf.xlu0
        %v1160 = vpop.trf.xlu0
        %v1161 = vpop.trf.xlu0
        %v1162 = vpop.trf.xlu0
        %v1163 = vpop.trf.xlu0
        %v1164 = vpop.trf.xlu0
        %v1165 = vpop.trf.xlu0
        %v1166 = vpop.trf.xlu0
        %v1167 = vpop.trf.xlu0
        %1168 = vxpose.xlu0.b32.start [1/16] %v1121, 128
        %1169 = vxpose.xlu0.b32.cont [2/16] 0.0, 128
        %1170 = vxpose.xlu0.b32.cont [3/16] 0.0, 128
        %1171 = vxpose.xlu0.b32.cont [4/16] 0.0, 128
        %1172 = vxpose.xlu0.b32.cont [5/16] 0.0, 128
        %1173 = vxpose.xlu0.b32.cont [6/16] 0.0, 128
        %1174 = vxpose.xlu0.b32.cont [7/16] 0.0, 128
        %1175 = vxpose.xlu0.b32.cont [8/16] 0.0, 128
        %1176 = vxpose.xlu0.b32.cont [9/16] 0.0, 128
        %1177 = vxpose.xlu0.b32.cont [10/16] 0.0, 128
        %1178 = vxpose.xlu0.b32.cont [11/16] 0.0, 128
        %1179 = vxpose.xlu0.b32.cont [12/16] 0.0, 128
        %1180 = vxpose.xlu0.b32.cont [13/16] 0.0, 128
        %1181 = vxpose.xlu0.b32.cont [14/16] 0.0, 128
        %1182 = vxpose.xlu0.b32.cont [15/16] 0.0, 128
        %1183 = vxpose.xlu0.b32.end [16/16] 0.0, 128
        %v1184 = vpop.trf.xlu0
        %v1185 = vpop.trf.xlu0
        %v1186 = vpop.trf.xlu0
        %v1187 = vpop.trf.xlu0
        %v1188 = vpop.trf.xlu0
        %v1189 = vpop.trf.xlu0
        %v1190 = vpop.trf.xlu0
        %v1191 = vpop.trf.xlu0
        %v1192 = vpop.trf.xlu0
        %v1193 = vpop.trf.xlu0
        %v1194 = vpop.trf.xlu0
        %v1195 = vpop.trf.xlu0
        %v1196 = vpop.trf.xlu0
        %v1197 = vpop.trf.xlu0
        %v1198 = vpop.trf.xlu0
        %v1199 = vpop.trf.xlu0
        %1200 = vxpose.xlu0.b32.start [1/16] %v1122, 128
        %1201 = vxpose.xlu0.b32.cont [2/16] 0.0, 128
        %1202 = vxpose.xlu0.b32.cont [3/16] 0.0, 128
        %1203 = vxpose.xlu0.b32.cont [4/16] 0.0, 128
        %1204 = vxpose.xlu0.b32.cont [5/16] 0.0, 128
        %1205 = vxpose.xlu0.b32.cont [6/16] 0.0, 128
        %1206 = vxpose.xlu0.b32.cont [7/16] 0.0, 128
        %1207 = vxpose.xlu0.b32.cont [8/16] 0.0, 128
        %1208 = vxpose.xlu0.b32.cont [9/16] 0.0, 128
        %1209 = vxpose.xlu0.b32.cont [10/16] 0.0, 128
        %1210 = vxpose.xlu0.b32.cont [11/16] 0.0, 128
        %1211 = vxpose.xlu0.b32.cont [12/16] 0.0, 128
        %1212 = vxpose.xlu0.b32.cont [13/16] 0.0, 128
        %1213 = vxpose.xlu0.b32.cont [14/16] 0.0, 128
        %1214 = vxpose.xlu0.b32.cont [15/16] 0.0, 128
        %1215 = vxpose.xlu0.b32.end [16/16] 0.0, 128
        %v1216 = vpop.trf.xlu0
        %v1217 = vpop.trf.xlu0
        %v1218 = vpop.trf.xlu0
        %v1219 = vpop.trf.xlu0
        %v1220 = vpop.trf.xlu0
        %v1221 = vpop.trf.xlu0
        %v1222 = vpop.trf.xlu0
        %v1223 = vpop.trf.xlu0
        %v1224 = vpop.trf.xlu0
        %v1225 = vpop.trf.xlu0
        %v1226 = vpop.trf.xlu0
        %v1227 = vpop.trf.xlu0
        %v1228 = vpop.trf.xlu0
        %v1229 = vpop.trf.xlu0
        %v1230 = vpop.trf.xlu0
        %v1231 = vpop.trf.xlu0
        %1232 = vxpose.xlu0.b32.start [1/16] %v1123, 128
        %1233 = vxpose.xlu0.b32.cont [2/16] 0.0, 128
        %1234 = vxpose.xlu0.b32.cont [3/16] 0.0, 128
        %1235 = vxpose.xlu0.b32.cont [4/16] 0.0, 128
        %1236 = vxpose.xlu0.b32.cont [5/16] 0.0, 128
        %1237 = vxpose.xlu0.b32.cont [6/16] 0.0, 128
        %1238 = vxpose.xlu0.b32.cont [7/16] 0.0, 128
        %1239 = vxpose.xlu0.b32.cont [8/16] 0.0, 128
        %1240 = vxpose.xlu0.b32.cont [9/16] 0.0, 128
        %1241 = vxpose.xlu0.b32.cont [10/16] 0.0, 128
        %1242 = vxpose.xlu0.b32.cont [11/16] 0.0, 128
        %1243 = vxpose.xlu0.b32.cont [12/16] 0.0, 128
        %1244 = vxpose.xlu0.b32.cont [13/16] 0.0, 128
        %1245 = vxpose.xlu0.b32.cont [14/16] 0.0, 128
        %1246 = vxpose.xlu0.b32.cont [15/16] 0.0, 128
        %1247 = vxpose.xlu0.b32.end [16/16] 0.0, 128
        %v1248 = vpop.trf.xlu0
        %v1249 = vpop.trf.xlu0
        %v1250 = vpop.trf.xlu0
        %v1251 = vpop.trf.xlu0
        %v1252 = vpop.trf.xlu0
        %v1253 = vpop.trf.xlu0
        %v1254 = vpop.trf.xlu0
        %v1255 = vpop.trf.xlu0
        %v1256 = vpop.trf.xlu0
        %v1257 = vpop.trf.xlu0
        %v1258 = vpop.trf.xlu0
        %v1259 = vpop.trf.xlu0
        %v1260 = vpop.trf.xlu0
        %v1261 = vpop.trf.xlu0
        %v1262 = vpop.trf.xlu0
        %v1263 = vpop.trf.xlu0
        %v1264 = vpack.c.bf16 %v1152, %v1152
        %v1265 = vpack.c.bf16 %v1184, %v1184
        %v1266 = vpack.c.bf16 %v1216, %v1216
        %v1267 = vpack.c.bf16 %v1248, %v1248
        %v1268 = vld [vmem:[#allocation2] sm:$0xf]
        %v1269 = vld [vmem:[#allocation2 + $0x4] sm:$0xf]
        %v1270 = vld [vmem:[#allocation2 + $0x8] sm:$0xf]
        %v1271 = vld [vmem:[#allocation2 + $0xc] sm:$0xf]
        %vm1272 = vcmask 64512
        %v1274 = vsel %vm1272, %v1264, 0
        %vm1276 = vcmask 1043456
        %v1278 = vsel %vm1276, %v1268, 0
        %1280 = vmatpush.bf16.msra.mxu0 0
        %1281 = vmatpush.bf16.msra.mxu0 0
        %1282 = vmatpush.bf16.msra.mxu0 0
        %1283 = vmatpush.bf16.msra.mxu0 0
        %1284 = vmatpush.bf16.msra.mxu0 0
        %1285 = vmatpush.bf16.msra.mxu0 0
        %1286 = vmatpush.bf16.msra.mxu0 0
        %1287 = vmatpush.bf16.msra.mxu0 %v1278
        %1288 = vmatmul.bf16.gmra.mxu0 %v1274
        %v1289 = vpop.f32.mrf.mxu0
        %v1290 = vadd.f32 0.0, %v1289
        %v1291 = vpop.f32.mrf.mxu0
        %1292 = vdwg.mxu0
        %v1294 = vsel %vm1272, %v1265, 0
        %v1297 = vsel %vm1276, %v1269, 0
        %1299 = vmatpush.bf16.msra.mxu0 0
        %1300 = vmatpush.bf16.msra.mxu0 0
        %1301 = vmatpush.bf16.msra.mxu0 0
        %1302 = vmatpush.bf16.msra.mxu0 0
        %1303 = vmatpush.bf16.msra.mxu0 0
        %1304 = vmatpush.bf16.msra.mxu0 0
        %1305 = vmatpush.bf16.msra.mxu0 0
        %1306 = vmatpush.bf16.msra.mxu0 %v1297
        %1307 = vmatmul.bf16.gmra.mxu0 %v1294
        %v1308 = vpop.f32.mrf.mxu0
        %v1309 = vadd.f32 0.0, %v1308
        %v1310 = vpop.f32.mrf.mxu0
        %1311 = vdwg.mxu0
        %v1313 = vsel %vm1272, %v1266, 0
        %v1316 = vsel %vm1276, %v1270, 0
        %1318 = vmatpush.bf16.msra.mxu0 0
        %1319 = vmatpush.bf16.msra.mxu0 0
        %1320 = vmatpush.bf16.msra.mxu0 0
        %1321 = vmatpush.bf16.msra.mxu0 0
        %1322 = vmatpush.bf16.msra.mxu0 0
        %1323 = vmatpush.bf16.msra.mxu0 0
        %1324 = vmatpush.bf16.msra.mxu0 0
        %1325 = vmatpush.bf16.msra.mxu0 %v1316
        %1326 = vmatmul.bf16.gmra.mxu0 %v1313
        %v1327 = vpop.f32.mrf.mxu0
        %v1328 = vadd.f32 0.0, %v1327
        %v1329 = vpop.f32.mrf.mxu0
        %1330 = vdwg.mxu0
        %v1332 = vsel %vm1272, %v1267, 0
        %v1335 = vsel %vm1276, %v1271, 0
        %1337 = vmatpush.bf16.msra.mxu0 0
        %1338 = vmatpush.bf16.msra.mxu0 0
        %1339 = vmatpush.bf16.msra.mxu0 0
        %1340 = vmatpush.bf16.msra.mxu0 0
        %1341 = vmatpush.bf16.msra.mxu0 0
        %1342 = vmatpush.bf16.msra.mxu0 0
        %1343 = vmatpush.bf16.msra.mxu0 0
        %1344 = vmatpush.bf16.msra.mxu0 %v1335
        %1345 = vmatmul.bf16.gmra.mxu0 %v1332
        %v1346 = vpop.f32.mrf.mxu0
        %v1347 = vadd.f32 0.0, %v1346
        %v1348 = vpop.f32.mrf.mxu0
        %1349 = vdwg.mxu0
        %v1350 = vsel %vm1272, %v1290, -inf
        %1351 = vmax.xlane.f32.xlu0 %v1350
        %v1352 = vpop.xlane.xlu0 %1351
        %v1353 = vsel %vm1272, %v1309, -inf
        %1354 = vmax.xlane.f32.xlu0 %v1353
        %v1355 = vpop.xlane.xlu0 %1354
        %v1356 = vsel %vm1272, %v1328, -inf
        %1357 = vmax.xlane.f32.xlu0 %v1356
        %v1358 = vpop.xlane.xlu0 %1357
        %v1359 = vsel %vm1272, %v1347, -inf
        %1360 = vmax.xlane.f32.xlu0 %v1359
        %v1361 = vpop.xlane.xlu0 %1360
        %v1362 = vsub.f32 %v1290, %v1352
        %v1363 = vsub.f32 %v1309, %v1355
        %v1364 = vsub.f32 %v1328, %v1358
        %v1365 = vsub.f32 %v1347, %v1361
        %v1366 = vmul.f32 %v1362, 1.442695
        %v1367 = vpow.pop %v1366
        %v1368 = vmul.f32 %v1363, 1.442695
        %v1369 = vpow.pop %v1368
        %v1370 = vmul.f32 %v1364, 1.442695
        %v1371 = vpow.pop %v1370
        %v1372 = vmul.f32 %v1365, 1.442695
        %v1373 = vpow.pop %v1372
        %v1374 = vsel %vm1272, %v1367, 0.0
        %1375 = vadd.xlane.f32.xlu0 %v1374
        %v1376 = vpop.xlane.xlu0 %1375
        %v1377 = vsel %vm1272, %v1369, 0.0
        %1378 = vadd.xlane.f32.xlu0 %v1377
        %v1379 = vpop.xlane.xlu0 %1378
        %v1380 = vsel %vm1272, %v1371, 0.0
        %1381 = vadd.xlane.f32.xlu0 %v1380
        %v1382 = vpop.xlane.xlu0 %1381
        %v1383 = vsel %vm1272, %v1373, 0.0
        %1384 = vadd.xlane.f32.xlu0 %v1383
        %v1385 = vpop.xlane.xlu0 %1384
        %v1386 = vrcp.pop %v1376
        %v1387 = vrcp.pop %v1379
        %v1388 = vrcp.pop %v1382
        %v1389 = vrcp.pop %v1385
        %v1390 = vmul.f32 %v1367, %v1386
        %v1391 = vmul.f32 %v1369, %v1387
        %v1392 = vmul.f32 %v1371, %v1388
        %v1393 = vmul.f32 %v1373, %v1389
        %1394 = vst.msk [vmem:[%s717] sm:$0xff] %vm1272, %v1390
        %1395 = vst.msk [vmem:[%s717 + $0x8] sm:$0xff] %vm1272, %v1391
        %1396 = vst.msk [vmem:[%s717 + $0x10] sm:$0xff] %vm1272, %v1392
        %1397 = vst.msk [vmem:[%s717 + $0x18] sm:$0xff] %vm1272, %v1393
        %v1398 = vld [vmem:[%s717] sm:$0xff]
        %v1399 = vld [vmem:[%s717 + $0x8] sm:$0xff]
        %v1400 = vld [vmem:[%s717 + $0x10] sm:$0xff]
        %v1401 = vld [vmem:[%s717 + $0x18] sm:$0xff]
        %v1402 = vpack.c.bf16 %v1398, %v1398
        %v1403 = vpack.c.bf16 %v1399, %v1399
        %v1404 = vpack.c.bf16 %v1400, %v1400
        %v1405 = vpack.c.bf16 %v1401, %v1401
        %v1406 = vld [vmem:[#allocation3] sm:$0xf]
        %v1407 = vld [vmem:[#allocation3 + $0x4] sm:$0xf]
        %v1408 = vld [vmem:[#allocation3 + $0x8] sm:$0xf]
        %v1409 = vld [vmem:[#allocation3 + $0xc] sm:$0xf]
        %v1411 = vsel %vm1272, %v1402, 0
        %v1414 = vsel %vm1276, %v1406, 0
        %1416 = vmatpush.bf16.msra.mxu0 0
        %1417 = vmatpush.bf16.msra.mxu0 0
        %1418 = vmatpush.bf16.msra.mxu0 0
        %1419 = vmatpush.bf16.msra.mxu0 0
        %1420 = vmatpush.bf16.msra.mxu0 0
        %1421 = vmatpush.bf16.msra.mxu0 0
        %1422 = vmatpush.bf16.msra.mxu0 0
        %1423 = vmatpush.bf16.msra.mxu0 %v1414
        %1424 = vmatmul.bf16.gmra.mxu0 %v1411
        %v1425 = vpop.f32.mrf.mxu0
        %v1426 = vadd.f32 0.0, %v1425
        %v1427 = vpop.f32.mrf.mxu0
        %1428 = vdwg.mxu0
        %v1430 = vsel %vm1272, %v1403, 0
        %v1433 = vsel %vm1276, %v1407, 0
        %1435 = vmatpush.bf16.msra.mxu0 0
        %1436 = vmatpush.bf16.msra.mxu0 0
        %1437 = vmatpush.bf16.msra.mxu0 0
        %1438 = vmatpush.bf16.msra.mxu0 0
        %1439 = vmatpush.bf16.msra.mxu0 0
        %1440 = vmatpush.bf16.msra.mxu0 0
        %1441 = vmatpush.bf16.msra.mxu0 0
        %1442 = vmatpush.bf16.msra.mxu0 %v1433
        %1443 = vmatmul.bf16.gmra.mxu0 %v1430
        %v1444 = vpop.f32.mrf.mxu0
        %v1445 = vadd.f32 0.0, %v1444
        %v1446 = vpop.f32.mrf.mxu0
        %1447 = vdwg.mxu0
        %v1449 = vsel %vm1272, %v1404, 0
        %v1452 = vsel %vm1276, %v1408, 0
        %1454 = vmatpush.bf16.msra.mxu0 0
        %1455 = vmatpush.bf16.msra.mxu0 0
        %1456 = vmatpush.bf16.msra.mxu0 0
        %1457 = vmatpush.bf16.msra.mxu0 0
        %1458 = vmatpush.bf16.msra.mxu0 0
        %1459 = vmatpush.bf16.msra.mxu0 0
        %1460 = vmatpush.bf16.msra.mxu0 0
        %1461 = vmatpush.bf16.msra.mxu0 %v1452
        %1462 = vmatmul.bf16.gmra.mxu0 %v1449
        %v1463 = vpop.f32.mrf.mxu0
        %v1464 = vadd.f32 0.0, %v1463
        %v1465 = vpop.f32.mrf.mxu0
        %1466 = vdwg.mxu0
        %v1468 = vsel %vm1272, %v1405, 0
        %v1471 = vsel %vm1276, %v1409, 0
        %1473 = vmatpush.bf16.msra.mxu0 0
        %1474 = vmatpush.bf16.msra.mxu0 0
        %1475 = vmatpush.bf16.msra.mxu0 0
        %1476 = vmatpush.bf16.msra.mxu0 0
        %1477 = vmatpush.bf16.msra.mxu0 0
        %1478 = vmatpush.bf16.msra.mxu0 0
        %1479 = vmatpush.bf16.msra.mxu0 0
        %1480 = vmatpush.bf16.msra.mxu0 %v1471
        %1481 = vmatmul.bf16.gmra.mxu0 %v1468
        %v1482 = vpop.f32.mrf.mxu0
        %v1483 = vadd.f32 0.0, %v1482
        %v1484 = vpop.f32.mrf.mxu0
        %1485 = vdwg.mxu0
        %v1486 = vpack.c.bf16 %v1426, %v1426
        %v1487 = vpack.c.bf16 %v1445, %v1445
        %v1488 = vpack.c.bf16 %v1464, %v1464
        %v1489 = vpack.c.bf16 %v1483, %v1483
        %v1490 = vld [vmem:[#allocation9] sm:$0xf]
        %v1491 = vld [vmem:[#allocation9 + $0x4] sm:$0xf]
        %v1492 = vld [vmem:[#allocation9 + $0x8] sm:$0xf]
        %v1493 = vld [vmem:[#allocation9 + $0xc] sm:$0xf]
        %v1495 = vsel %vm1272, %v1486, 0
        %v1498 = vsel %vm1276, %v1490, 0
        %1500 = vmatpush.bf16.msra.mxu0 0
        %1501 = vmatpush.bf16.msra.mxu0 0
        %1502 = vmatpush.bf16.msra.mxu0 0
        %1503 = vmatpush.bf16.msra.mxu0 0
        %1504 = vmatpush.bf16.msra.mxu0 0
        %1505 = vmatpush.bf16.msra.mxu0 0
        %1506 = vmatpush.bf16.msra.mxu0 0
        %1507 = vmatpush.bf16.msra.mxu0 %v1498
        %1508 = vmatmul.bf16.gmra.mxu0 %v1495
        %v1509 = vpop.f32.mrf.mxu0
        %v1510 = vadd.f32 0.0, %v1509
        %v1511 = vpop.f32.mrf.mxu0
        %1512 = vdwg.mxu0
        %v1514 = vsel %vm1272, %v1487, 0
        %v1517 = vsel %vm1276, %v1491, 0
        %1519 = vmatpush.bf16.msra.mxu0 0
        %1520 = vmatpush.bf16.msra.mxu0 0
        %1521 = vmatpush.bf16.msra.mxu0 0
        %1522 = vmatpush.bf16.msra.mxu0 0
        %1523 = vmatpush.bf16.msra.mxu0 0
        %1524 = vmatpush.bf16.msra.mxu0 0
        %1525 = vmatpush.bf16.msra.mxu0 0
        %1526 = vmatpush.bf16.msra.mxu0 %v1517
        %1527 = vmatmul.bf16.gmra.mxu0 %v1514
        %v1528 = vpop.f32.mrf.mxu0
        %v1529 = vadd.f32 0.0, %v1528
        %v1530 = vpop.f32.mrf.mxu0
        %1531 = vdwg.mxu0
        %v1533 = vsel %vm1272, %v1488, 0
        %v1536 = vsel %vm1276, %v1492, 0
        %1538 = vmatpush.bf16.msra.mxu0 0
        %1539 = vmatpush.bf16.msra.mxu0 0
        %1540 = vmatpush.bf16.msra.mxu0 0
        %1541 = vmatpush.bf16.msra.mxu0 0
        %1542 = vmatpush.bf16.msra.mxu0 0
        %1543 = vmatpush.bf16.msra.mxu0 0
        %1544 = vmatpush.bf16.msra.mxu0 0
        %1545 = vmatpush.bf16.msra.mxu0 %v1536
        %1546 = vmatmul.bf16.gmra.mxu0 %v1533
        %v1547 = vpop.f32.mrf.mxu0
        %v1548 = vadd.f32 0.0, %v1547
        %v1549 = vpop.f32.mrf.mxu0
        %1550 = vdwg.mxu0
        %v1552 = vsel %vm1272, %v1489, 0
        %v1555 = vsel %vm1276, %v1493, 0
        %1557 = vmatpush.bf16.msra.mxu0 0
        %1558 = vmatpush.bf16.msra.mxu0 0
        %1559 = vmatpush.bf16.msra.mxu0 0
        %1560 = vmatpush.bf16.msra.mxu0 0
        %1561 = vmatpush.bf16.msra.mxu0 0
        %1562 = vmatpush.bf16.msra.mxu0 0
        %1563 = vmatpush.bf16.msra.mxu0 0
        %1564 = vmatpush.bf16.msra.mxu0 %v1555
        %1565 = vmatmul.bf16.gmra.mxu0 %v1552
        %v1566 = vpop.f32.mrf.mxu0
        %v1567 = vadd.f32 0.0, %v1566
        %v1568 = vpop.f32.mrf.mxu0
        %1569 = vdwg.mxu0
        %v1570 = vsel %vm1013, %v1510, 0.0
        %v1571 = vsel %vm1013, %v1529, 0.0
        %v1572 = vadd.f32 %v1570, %v1571
        %v1573 = vsel %vm1013, %v1548, 0.0
        %v1574 = vadd.f32 %v1572, %v1573
        %v1575 = vsel %vm1013, %v1567, 0.0
        %v1576 = vadd.f32 %v1574, %v1575
        %v1577 = vadd.f32 %v726, %v1576
        %v1578 = vld [vmem:[%s9] sm:$0x1]
        %v1580 = vperm.slane %v1578, 0
        %v1582 = vadd.f32 %v1577, %v1580
        %v1583 = vld [vmem:[%s16] sm:$0x1]
        %v1584 = vld [vmem:[%s17] sm:$0x1]
        %v1585 = vsel %vm1013, %v1582, 0.0
        %1586 = vadd.xlane.f32.xlu0 %v1585
        %v1587 = vpop.xlane.xlu0 %1586
        %v1588 = vmul.f32 %v1587, %v1023
        %v1589 = vsub.f32 %v1582, %v1588
        %v1590 = vmul.f32 %v1589, %v1589
        %v1591 = vsel %vm1013, %v1590, 0.0
        %1592 = vadd.xlane.f32.xlu0 %v1591
        %v1593 = vpop.xlane.xlu0 %1592
        %v1594 = vmul.f32 %v1593, 0.032258064
        %v1595 = vrsqrt.pop %v1594
        %v1596 = vmul.f32 %v1595, %v1594
        %v1597 = vmul.f32 %v1596, %v1595
        %v1598 = vmul.f32 0.5, %v1597
        %v1599 = vsub.f32 1.5, %v1598
        %v1600 = vmul.f32 %v1595, %v1599
        %v1601 = vmul.f32 %v1594, %v1600
        %vm1602 = vcmp.eq.f32.partialorder %v1594, inf
        %v1603 = vsel %vm1602, %v1594, %v1601
        %vm1604 = vcmp.eq.f32.partialorder %v1594, 0.0
        %v1605 = vand.u32 %v1594, 2147483648
        %v1606 = vsel %vm1604, %v1605, %v1603
        %v1607 = vadd.f32 %v1606, 1e-06
        %v1608 = vrcp.pop %v1607
        %v1609 = vmul.f32 %v1607, %v1608
        %v1610 = vsub.f32 1.0, %v1609
        %v1611 = vmul.f32 %v1608, %v1610
        %v1612 = vadd.f32 %v1608, %v1611
        %vm1613 = vweird.f32 %v1607
        %vm1614 = vweird.f32 %v1608
        %vm1615 = vmor %vm1613, %vm1614
        %v1616 = vsel %vm1615, %v1608, %v1612
        %v1617 = vand.u32 2147483647, %v1607
        %vm1618 = vcmp.eq.f32.partialorder %v1617, 8.507059e+37
        %v1619 = vand.u32 %v1607, 2147483648
        %v1620 = vor.u32 1.1754944e-38, %v1619
        %v1621 = vsel %vm1618, %v1620, %v1616
        %v1622 = vmul.f32 %v1589, %v1621
        %v1624 = vperm.slane %v1583, 0
        %v1626 = vmul.f32 %v1624, %v1622
        %v1628 = vperm.slane %v1584, 0
        %v1630 = vadd.f32 %v1626, %v1628
        %v1631 = vpack.c.bf16 %v1630, %v1630
        %v1632 = vld [vmem:[#allocation10] sm:$0xf]
        %v1633 = vld [vmem:[#allocation10 + $0x4] sm:$0xf]
        %v1634 = vld [vmem:[#allocation10 + $0x8] sm:$0xf]
        %v1635 = vld [vmem:[#allocation10 + $0xc] sm:$0xf]
        %v1636 = vld [vmem:[%s11] sm:$0x1]
        %v1638 = vperm.slane %v1636, 0
        %v1644 = vunpack.c.l.b16 %v1632
        %v1645 = vunpack.c.l.b16 %v1633
        %v1646 = vunpack.c.l.b16 %v1634
        %v1647 = vunpack.c.l.b16 %v1635
        %v1648 = vpack.c.b16 %v1645, %v1644
        %v1649 = vpack.c.b16 %v1647, %v1646
        %v1653 = vsel %vm1013, %v1631, 0
        %1655 = vmatpush.bf16.msra.mxu0 0
        %1656 = vmatpush.bf16.msra.mxu0 0
        %1657 = vmatpush.bf16.msra.mxu0 0
        %1658 = vmatpush.bf16.msra.mxu0 0
        %1659 = vmatpush.bf16.msra.mxu0 0
        %1660 = vmatpush.bf16.msra.mxu0 0
        %1661 = vmatpush.bf16.msra.mxu0 %v1649
        %1662 = vmatpush.bf16.msra.mxu0 %v1648
        %1663 = vmatmul.bf16.gmra.mxu0 %v1653
        %v1664 = vpop.f32.mrf.mxu0
        %v1665 = vadd.f32 %v1638, %v1664
        %v1666 = vpop.f32.mrf.mxu0
        %1667 = vdwg.mxu0
        %v1668 = vmax.f32 %v1665, 0.0
        %v1669 = vpack.c.bf16 %v1668, %v1668
        %v1670 = vld [vmem:[%s12] sm:$0xf]
        %v1671 = vld [vmem:[%s12 + $0x4] sm:$0xf]
        %v1672 = vld [vmem:[%s12 + $0x8] sm:$0xf]
        %v1673 = vld [vmem:[%s12 + $0xc] sm:$0xf]
        %v1674 = vld [vmem:[%s12 + $0x10] sm:$0xf]
        %v1675 = vld [vmem:[%s12 + $0x14] sm:$0xf]
        %v1676 = vld [vmem:[%s12 + $0x18] sm:$0xf]
        %v1677 = vld [vmem:[%s12 + $0x1c] sm:$0xf]
        %v1678 = vld [vmem:[%s13] sm:$0x1]
        %v1680 = vperm.slane %v1678, 0
        %v1690 = vunpack.c.l.b16 %v1670
        %v1691 = vunpack.c.l.b16 %v1671
        %v1692 = vunpack.c.l.b16 %v1672
        %v1693 = vunpack.c.l.b16 %v1673
        %v1694 = vunpack.c.l.b16 %v1674
        %v1695 = vunpack.c.l.b16 %v1675
        %v1696 = vunpack.c.l.b16 %v1676
        %v1697 = vunpack.c.l.b16 %v1677
        %v1698 = vpack.c.b16 %v1691, %v1690
        %v1699 = vpack.c.b16 %v1693, %v1692
        %v1700 = vpack.c.b16 %v1695, %v1694
        %v1701 = vpack.c.b16 %v1697, %v1696
        %vm1706 = vcmask 523264
        %v1708 = vsel %vm1706, %v1669, 0
        %1710 = vmatpush.bf16.msra.mxu0 0
        %1711 = vmatpush.bf16.msra.mxu0 0
        %1712 = vmatpush.bf16.msra.mxu0 0
        %1713 = vmatpush.bf16.msra.mxu0 0
        %1714 = vmatpush.bf16.msra.mxu0 %v1701
        %1715 = vmatpush.bf16.msra.mxu0 %v1700
        %1716 = vmatpush.bf16.msra.mxu0 %v1699
        %1717 = vmatpush.bf16.msra.mxu0 %v1698
        %1718 = vmatmul.bf16.gmra.mxu0 %v1708
        %v1719 = vpop.f32.mrf.mxu0
        %v1720 = vadd.f32 %v1680, %v1719
        %v1721 = vpop.f32.mrf.mxu0
        %1722 = vdwg.mxu0
        %v1723 = vadd.f32 %v1582, %v1720
        %1724 = vst.msk [vmem:[%s710] sm:$0xff] %vm1013, %v1723
        %s1725 = sand.u32 %s454, 1
        %s1726 = scalar_lea.sflag [#allocation6], %s1725
        %s1727 = sand.u32 %s454, 1
        %s1728 = smul.addr %s1727, 8
        %s1729 = scalar_lea.vmem [#allocation12], %s1728
        %s1730 = sand.u32 %s482, 1
        %s1731 = scalar_lea.sflag [#allocation14], %s1730
        %s1732 = sand.u32 %s482, 1
        %s1733 = smul.addr %s1732, 32
        %s1734 = scalar_lea.vmem [#allocation13], %s1733
        // Predicated region
        $region113: #{tpu_custom_call.1} parent=91 // pred_check
          %p1735 = pneg %p464
        $region114: #{tpu_custom_call.1} parent=91 // pred_check_branch
          %1737 = sbr.rel (%p1735) target = $region116
        $region115: #{tpu_custom_call.1} parent=91 // pred_region
          %1739 = vsyncadd %s1726, 0
          %s1740 = sadd.s32 %s47, %s46
          %s1741 = smul.addr %s1740, 8
          %s1742 = scalar_lea.hbm %s18, %s1741
          %s1744 = sshll.u32 %s1729, 4
          %s1745 = int_to_ptr.vmem [resolvable:$true] %s1744
          %s1746 = sshll.u32 %s1742, 4
          %s1747 = int_to_ptr.hbm [resolvable:$true] %s1746
          %1749 = dma.vmem_to_hbm [thread:$0]  %s1745, 128, %s1747, %s1726
        $region116: #{tpu_custom_call.1} parent=91 // pred_fallthru
          _
        // Predicated region
        $region117: #{tpu_custom_call.1} parent=91 // pred_check
          %p1750 = pneg %p492
        $region118: #{tpu_custom_call.1} parent=91 // pred_check_branch
          %1752 = sbr.rel (%p1750) target = $region120
        $region119: #{tpu_custom_call.1} parent=91 // pred_region
          %1754 = vsyncadd %s1731, 0
          %s1755 = smul.addr %s46, 4
          %s1756 = sadd.s32 %s47, %s1755
          %s1757 = smul.addr %s1756, 8
          %s1758 = scalar_lea.hbm %s19, %s1757
          %s1759 = sshll.u32 %s1734, 4
          %s1760 = int_to_ptr.vmem [resolvable:$true] %s1759
          %s1761 = sshll.u32 %s1758, 4
          %s1762 = int_to_ptr.hbm [resolvable:$true] %s1761
          %1767 = dma.vmem_to_hbm [thread:$0]  %s1760, 512, %s1762, %s1731, 128, 128, 8
        $region120: #{tpu_custom_call.1} parent=91 // pred_fallthru
          _
      $region92: #{tpu_custom_call.1} parent=5 // pred_fallthru
        _
      %p1768 = scmp.le.s32.totalorder 2, %s37
      // Predicated region
      $region121: #{tpu_custom_call.1} parent=5 // pred_check
        %p1769 = pneg %p1768
      $region122: #{tpu_custom_call.1} parent=5 // pred_check_branch
        %1771 = sbr.rel (%p1769) target = $region124
      $region123: #{tpu_custom_call.1} parent=5 // pred_region
        %s1772 = ssub.s32 %s37, 2
        // Predicated region
        $region125: #{tpu_custom_call.1} parent=123 // pred_check
          %p1773 = pneg %p470
        $region126: #{tpu_custom_call.1} parent=123 // pred_check_branch
          %1775 = sbr.rel (%p1773) target = $region128
        $region127: #{tpu_custom_call.1} parent=123 // pred_region
          %s1776 = sand.u32 %s455, 1
          %s1777 = scalar_lea.sflag [#allocation6], %s1776
          %s1778 = sand.u32 %s455, 1
          %s1779 = smul.addr %s1778, 8
          %s1780 = scalar_lea.vmem [#allocation12], %s1779
          %1782 = dma.done %s1777, 128
        $region128: #{tpu_custom_call.1} parent=123 // pred_fallthru
          _
        // Predicated region
        $region129: #{tpu_custom_call.1} parent=123 // pred_check
          %p1783 = pneg %p498
        $region130: #{tpu_custom_call.1} parent=123 // pred_check_branch
          %1785 = sbr.rel (%p1783) target = $region132
        $region131: #{tpu_custom_call.1} parent=123 // pred_region
          %s1786 = sand.u32 %s483, 1
          %s1787 = scalar_lea.sflag [#allocation14], %s1786
          %s1788 = sand.u32 %s483, 1
          %s1789 = smul.addr %s1788, 32
          %s1790 = scalar_lea.vmem [#allocation13], %s1789
          %1792 = dma.done %s1787, 512
        $region132: #{tpu_custom_call.1} parent=123 // pred_fallthru
          _
      $region124: #{tpu_custom_call.1} parent=5 // pred_fallthru
        _
    $region6: #{tpu_custom_call.1} parent=1 // loop_footer
      %s41 = sadd.s32 1, %s37
    $region7: #{tpu_custom_call.1} parent=1 // loop_footer_branch
      %36 = sbr.rel target = $region3
    $region8: #{tpu_custom_call.1} parent=1 // loop_exit
      _
    %1793 = vsyncpa [#allocation5], 1
    %s1794 = scalar_lea.sflag [#allocation5], 1
    %1795 = vsyncpa %s1794, 1
    %1796 = vsyncpa [#allocation8], 1
    %1797 = vsyncpa [#allocation11], 1
    %1798 = vsyncpa [#allocation6], 1
    %s1799 = scalar_lea.sflag [#allocation6], 1
    %1800 = vsyncpa %s1799, 1
    %1801 = vsyncpa [#allocation14], 1
    %s1802 = scalar_lea.sflag [#allocation14], 1
    %1803 = vsyncpa %s1802, 1

</llo_original>
